<compile_context>
chip_gen: v6e
topology: v6e:2x2x1
jax: 0.10.0
libtpu: 0.0.40
codegen_flags: <defaults>
</compile_context>

<pallas_src>
import functools

import jax
import jax.numpy as jnp
from jax import lax
from jax.experimental import pallas as pl
from jax.experimental.pallas import tpu as pltpu

BN_EPS = 1e-5
_VMEM_BUDGET = 24 << 20        # streamed tiles + weights target (v7x: 64 MiB phys)
_VMEM_DEFAULT_SAFE = 12 << 20  # below this, trust the default scoped VMEM limit


# ----------------------------- kernels -------------------------------------


def _mask_ragged(v, hw, t):
    """Zero lanes past the true spatial extent (last ragged spatial tile only)."""
    col = pl.program_id(1) * t + lax.broadcasted_iota(jnp.int32, v.shape, 1)
    return jnp.where(col < hw, v, 0.0)


def _conv_bn_relu_conv(x_n, w1_ref, sh1_ref, w2_ref):
    """x (Cin,T) -> folded conv1+BN1 -> ReLU -> conv2 (bias-free; BN2 absorbs it)."""
    y = jnp.dot(w1_ref[...], x_n, preferred_element_type=jnp.float32) + sh1_ref[...]
    h = jnp.maximum(y, 0.0).astype(w2_ref.dtype)
    return jnp.dot(w2_ref[...], h, preferred_element_type=jnp.float32)


def _stats1_kernel(x_ref, w1_ref, s_ref, sq_ref, *, nb, hw, t):
    """Per-channel partial sum / sum-of-squares of the (bias-free) conv1 output."""
    @pl.when(pl.program_id(1) == 0)
    def _():
        s_ref[...] = jnp.zeros_like(s_ref)
        sq_ref[...] = jnp.zeros_like(sq_ref)

    s = jnp.zeros(s_ref.shape[1:], jnp.float32)
    sq = jnp.zeros(sq_ref.shape[1:], jnp.float32)
    for n in range(nb):                                   # static unroll (nb small)
        y = jnp.dot(w1_ref[...], x_ref[n], preferred_element_type=jnp.float32)
        if hw % t:
            y = _mask_ragged(y, hw, t)
        s = s + jnp.sum(y, axis=1, keepdims=True)
        sq = sq + jnp.sum(y * y, axis=1, keepdims=True)
    s_ref[0] += s
    sq_ref[0] += sq


def _stats2_kernel(x_ref, w1_ref, sh1_ref, w2_ref, s_ref, sq_ref, *, nb, hw, t):
    """Per-channel partial sum / sum-of-squares of the (bias-free) conv2 output."""
    @pl.when(pl.program_id(1) == 0)
    def _():
        s_ref[...] = jnp.zeros_like(s_ref)
        sq_ref[...] = jnp.zeros_like(sq_ref)

    s = jnp.zeros(s_ref.shape[1:], jnp.float32)
    sq = jnp.zeros(sq_ref.shape[1:], jnp.float32)
    for n in range(nb):
        z = _conv_bn_relu_conv(x_ref[n], w1_ref, sh1_ref, w2_ref)
        if hw % t:
            z = _mask_ragged(z, hw, t)
        s = s + jnp.sum(z, axis=1, keepdims=True)
        sq = sq + jnp.sum(z * z, axis=1, keepdims=True)
    s_ref[0] += s
    sq_ref[0] += sq


def _apply_kernel(x_ref, w1_ref, sh1_ref, w2_ref, sh2_ref, o_ref, *, nb):
    """Full fused block: conv1 -> BN1 -> ReLU -> conv2 -> BN2 -> +x -> ReLU."""
    for n in range(nb):
        x_n = x_ref[n]
        z = _conv_bn_relu_conv(x_n, w1_ref, sh1_ref, w2_ref)
        z = z + sh2_ref[...] + x_n.astype(jnp.float32)     # BN2 shift + identity
        o_ref[n] = jnp.maximum(z, 0.0).astype(o_ref.dtype)


# ----------------------------- wrapper --------------------------------------


def _bn_affine(s_part, sq_part, gamma, beta, m_total):
    """Fold batch stats + BN affine into per-channel scale/shift, shape (C, 1)."""
    s = jnp.sum(s_part, axis=0)[:, 0]
    sq = jnp.sum(sq_part, axis=0)[:, 0]
    mu = s / m_total
    # NOTE: E[x^2]-E[x]^2 with f32 partial sums; fine at these scales (see review).
    var = jnp.maximum(sq / m_total - mu * mu, 0.0)
    inv = lax.rsqrt(var + BN_EPS)
    scale = (gamma * inv).astype(jnp.float32)
    shift = (beta - mu * scale).astype(jnp.float32)
    return scale[:, None], shift[:, None]


def _round_up(v, m):
    return -(-v // m) * m


def _choose_tiling(N, HW, Cin, Cout, itemsize, w_bytes, spatial_tile):
    """Pick (NB images per step, spatial tile T, spatial tile count HWT)."""
    if HW > spatial_tile:
        hwt = pl.cdiv(HW, spatial_tile)
        T = _round_up(pl.cdiv(HW, hwt), 128)               # 128-multiple, least waste
        while T > 128 and 2 * (Cin + Cout) * T * itemsize + w_bytes > _VMEM_BUDGET:
            T -= 128                                        # v7x 64 MiB VMEM budget
        NB = 1
    else:
        T = HW                                              # full extent (always legal)
        per_img = 2 * (Cin + Cout) * max(T, 1) * itemsize
        nb_budget = max(1, int((_VMEM_BUDGET - w_bytes) // per_img))
        nb_target = max(1, min(spatial_tile // max(HW, 1), nb_budget, N))
        NB = 1
        for d in range(nb_target, 0, -1):                   # largest divisor of N
            if N % d == 0:
                NB = d
                break
    return NB, T, pl.cdiv(HW, T)


def resblock_forward(x_nchw, params, *, spatial_tile=1024, io_dtype=None):
    """ResBlock forward (training-mode BN).  x_nchw: (N, Cin, H, W) -> same shape.

    io_dtype=jnp.bfloat16 streams x/out (and runs the MXU) in bf16: ~half the HBM
    traffic of the dominant x sweeps at ~1e-2 absolute error vs. the f32 module.
    """
    w1, b1, g1, be1, w2, b2, g2, be2 = params
    del b1, b2  # pre-BN conv biases are absorbed exactly by training-mode BN
    N, Cin, H, W = x_nchw.shape
    Cmid, Cout = w1.shape[0], w2.shape[0]
    assert w1.shape == (Cmid, Cin) and w2.shape == (Cout, Cmid)
    assert Cout == Cin, "identity residual requires in_channels == out_channels * 4"

    io_dtype = x_nchw.dtype if io_dtype is None else jnp.dtype(io_dtype)
    f32 = jnp.float32
    HW = H * W
    m_total = jnp.asarray(N * HW, f32)

    itemsize = jnp.dtype(io_dtype).itemsize
    w_bytes = 2 * (Cmid * Cin + Cout * Cmid) * itemsize + 2 * (Cmid + Cout) * 2 * 4
    NB, T, HWT = _choose_tiling(N, HW, Cin, Cout, itemsize, w_bytes, spatial_tile)
    NGB = N // NB                                           # outer (parallel) grid

    # One wrapper-side cast; the kernels never re-cast operands per step.
    x3 = x_nchw.reshape(N, Cin, HW).astype(io_dtype)
    w1c = w1.astype(io_dtype)

    x_spec = pl.BlockSpec((NB, Cin, T), lambda g, t: (g, 0, t))
    full = lambda a: pl.BlockSpec(a.shape, lambda g, t: (0,) * a.ndim)
    stat_spec = lambda C: pl.BlockSpec((1, C, 1), lambda g, t: (g, 0, 0))

    est_vmem = 2 * NB * (Cin + Cout) * T * itemsize + w_bytes + (1 << 20)
    vmem_limit = None if est_vmem <= _VMEM_DEFAULT_SAFE else min(
        int(est_vmem * 3 // 2), 64 << 20)

    def cparams(sem):
        kw = dict(dimension_semantics=sem)
        if vmem_limit is not None:
            kw["vmem_limit_bytes"] = vmem_limit
        return pltpu.CompilerParams(**kw)

    # ---- pass 1: conv1 per-channel statistics (bias-free) -------------------
    s1, sq1 = pl.pallas_call(
        functools.partial(_stats1_kernel, nb=NB, hw=HW, t=T),
        out_shape=(jax.ShapeDtypeStruct((NGB, Cmid, 1), f32),
                   jax.ShapeDtypeStruct((NGB, Cmid, 1), f32)),
        grid=(NGB, HWT),
        in_specs=[x_spec, full(w1c)],
        out_specs=(stat_spec(Cmid), stat_spec(Cmid)),
        compiler_params=cparams(("parallel", "arbitrary")),
    )(x3, w1c)
    scale1, shift1 = _bn_affine(s1, sq1, g1, be1, m_total)
    w1f = (scale1 * w1.astype(f32)).astype(io_dtype)        # BN1 folded into conv1
    w2c = w2.astype(io_dtype)

    # ---- pass 2: conv2 per-channel statistics --------------------------------
    s2, sq2 = pl.pallas_call(
        functools.partial(_stats2_kernel, nb=NB, hw=HW, t=T),
        out_shape=(jax.ShapeDtypeStruct((NGB, Cout, 1), f32),
                   jax.ShapeDtypeStruct((NGB, Cout, 1), f32)),
        grid=(NGB, HWT),
        in_specs=[x_spec, full(w1f), full(shift1), full(w2c)],
        out_specs=(stat_spec(Cout), stat_spec(Cout)),
        compiler_params=cparams(("parallel", "arbitrary")),
    )(x3, w1f, shift1, w2c)
    scale2, shift2 = _bn_affine(s2, sq2, g2, be2, m_total)
    w2f = (scale2 * w2.astype(f32)).astype(io_dtype)        # BN2 folded into conv2

    # ---- pass 3: apply the whole fused block ----------------------------------
    out3 = pl.pallas_call(
        functools.partial(_apply_kernel, nb=NB),
        out_shape=jax.ShapeDtypeStruct((N, Cout, HW), io_dtype),
        grid=(NGB, HWT),
        in_specs=[x_spec, full(w1f), full(shift1), full(w2f), full(shift2)],
        out_specs=pl.BlockSpec((NB, Cout, T), lambda g, t: (g, 0, t)),
        compiler_params=cparams(("parallel", "parallel")),
    )(x3, w1f, shift1, w2f, shift2)

    return out3.reshape(N, Cout, H, W)


# ----------------------------- reference & test ------------------------------


def reference_forward(x_nchw, params):
    """Pure-JAX reference mirroring the PyTorch forward (training-mode BN)."""
    w1, b1, g1, be1, w2, b2, g2, be2 = params
    N, Cin, H, W = x_nchw.shape
    x = x_nchw.reshape(N, Cin, H * W).astype(jnp.float32)

    def bn(v, g, be):
        mu = v.mean(axis=(0, 2), keepdims=True)
        var = jnp.square(v - mu).mean(axis=(0, 2), keepdims=True)
        return (v - mu) * lax.rsqrt(var + BN_EPS) * g[None, :, None] + be[None, :, None]

    y = jnp.einsum("oc,nct->not", w1, x,
                   precision=lax.Precision.HIGHEST) + b1[None, :, None]
    y = jnp.maximum(bn(y, g1, be1), 0.0)
    z = jnp.einsum("oc,nct->not", w2, y,
                   precision=lax.Precision.HIGHEST) + b2[None, :, None]
    z = bn(z, g2, be2) + x
    return jnp.maximum(z, 0.0).reshape(N, -1, H, W).astype(x_nchw.dtype)


def init_params(key, in_channels, out_channels):
    """Deterministic synthetic parameters matching ResBlock.__init__ shapes."""
    expansion = 4
    c_mid = out_channels
    c_out = out_channels * expansion
    assert c_out == in_channels
    k1, k2, k3, k4 = jax.random.split(key, 4)
    # conv weights in PyTorch layout (out_ch, in_ch) with the 1x1 kernel squeezed.
    w1 = jax.random.normal(k1, (c_mid, in_channels), jnp.float32) * 0.1
    b1 = jax.random.normal(k2, (c_mid,), jnp.float32) * 0.05
    w2 = jax.random.normal(k3, (c_out, c_mid), jnp.float32) * 0.1
    b2 = jax.random.normal(k4, (c_out,), jnp.float32) * 0.05
    g1 = jnp.ones((c_mid,), jnp.float32)
    be1 = jnp.zeros((c_mid,), jnp.float32)
    g2 = jnp.ones((c_out,), jnp.float32)
    be2 = jnp.zeros((c_out,), jnp.float32)
    return (w1, b1, g1, be1, w2, b2, g2, be2)


if __name__ == "__main__":
    # Small shapes consistent with the module: identity add (no downsample)
    # forces in_channels == out_channels * 4.
    N, H, W = 2, 8, 8
    out_channels = 32
    in_channels = out_channels * 4  # 128

    key = jax.random.PRNGKey(0)
    kx, kp = jax.random.split(key)
    x = jax.random.normal(kx, (N, in_channels, H, W), jnp.float32)
    params = init_params(kp, in_channels, out_channels)

    ref = reference_forward(x, params)

    # f32 path: matches the f32 PyTorch module tightly.
    out = jax.block_until_ready(jax.jit(resblock_forward)(x, params))
    assert out.shape == (N, in_channels, H, W)
    assert jnp.allclose(out, ref, atol=1e-4, rtol=1e-4), "f32 mismatch vs reference"

    # bf16 streaming path: halves the dominant HBM traffic; ~1e-2 abs error.
    fwd_bf16 = jax.jit(functools.partial(resblock_forward, io_dtype=jnp.bfloat16))
    out_bf = jax.block_until_ready(fwd_bf16(x, params))
    assert out_bf.dtype == jnp.bfloat16
    assert jnp.allclose(out_bf.astype(jnp.float32), ref, atol=1.5e-1, rtol=5e-2), \
        "bf16 mismatch vs reference"

    print("KERNEL_OK")
</pallas_src>

<mosaic_0001>
module attributes {stable_mosaic.version = 11 : i64} {
  func.func @_stats1_kernel(%arg0: i32, %arg1: i32, %arg2: memref<2x128x64xf32, #tpu.memory_space<vmem>>, %arg3: memref<32x128xf32, #tpu.memory_space<vmem>>, %arg4: memref<1x32x1xf32, #tpu.memory_space<vmem>>, %arg5: memref<1x32x1xf32, #tpu.memory_space<vmem>>) attributes {dimension_semantics = [#tpu.dimension_semantics<parallel>, #tpu.dimension_semantics<arbitrary>], iteration_bounds = array<i64: 1, 1>, scalar_prefetch = 0 : i64, scratch_operands = 0 : i64, tpu.core_type = #tpu.core_type<tc>, window_params = [{transform_indices = @transform_0, window_bounds = array<i64: 2, 128, 64>}, {pipeline_mode = #tpu.pipeline_mode<synchronous>, transform_indices = @transform_1, window_bounds = array<i64: 32, 128>}, {transform_indices = @transform_2, window_bounds = array<i64: 1, 32, 1>}, {transform_indices = @transform_3, window_bounds = array<i64: 1, 32, 1>}]} {
    %c0_i32 = arith.constant 0 : i32
    %0 = arith.cmpi eq, %arg1, %c0_i32 : i32
    %1 = arith.extui %0 : i1 to i32
    %c0_i32_0 = arith.constant 0 : i32
    %2 = arith.cmpi ne, %1, %c0_i32_0 : i32
    scf.if %2 {
      %cst_28 = arith.constant 0.000000e+00 : f32
      %39 = vector.broadcast %cst_28 : f32 to vector<1x32x1xf32>
      %c0_29 = arith.constant 0 : index
      %c0_30 = arith.constant 0 : index
      %c0_31 = arith.constant 0 : index
      %40 = vector.load %arg4[%c0_29, %c0_30, %c0_31] : memref<1x32x1xf32, #tpu.memory_space<vmem>>, vector<1x32x1xf32>
      tpu.vector_store %arg4[%c0_29, %c0_30, %c0_31], %39 {strides = array<i32>} : memref<1x32x1xf32, #tpu.memory_space<vmem>>, vector<1x32x1xf32>,
      %cst_32 = arith.constant 0.000000e+00 : f32
      %41 = vector.broadcast %cst_32 : f32 to vector<1x32x1xf32>
      %c0_33 = arith.constant 0 : index
      %c0_34 = arith.constant 0 : index
      %c0_35 = arith.constant 0 : index
      %42 = vector.load %arg5[%c0_33, %c0_34, %c0_35] : memref<1x32x1xf32, #tpu.memory_space<vmem>>, vector<1x32x1xf32>
      tpu.vector_store %arg5[%c0_33, %c0_34, %c0_35], %41 {strides = array<i32>} : memref<1x32x1xf32, #tpu.memory_space<vmem>>, vector<1x32x1xf32>,
    } else {
    }
    %cst = arith.constant 0.000000e+00 : f32
    %3 = vector.broadcast %cst : f32 to vector<32x1xf32>
    %cst_1 = arith.constant 0.000000e+00 : f32
    %4 = vector.broadcast %cst_1 : f32 to vector<32x1xf32>
    %c0 = arith.constant 0 : index
    %c0_2 = arith.constant 0 : index
    %5 = vector.load %arg3[%c0, %c0_2] : memref<32x128xf32, #tpu.memory_space<vmem>>, vector<32x128xf32>
    %c0_3 = arith.constant 0 : index
    %c0_4 = arith.constant 0 : index
    %c0_5 = arith.constant 0 : index
    %6 = vector.load %arg2[%c0_3, %c0_4, %c0_5] : memref<2x128x64xf32, #tpu.memory_space<vmem>>, vector<1x128x64xf32>
    %7 = vector.shape_cast %6 : vector<1x128x64xf32> to vector<128x64xf32>
    %cst_6 = arith.constant dense<0.000000e+00> : vector<32x64xf32>
    %8 = tpu.matmul %5, %7, %cst_6 {dimension_numbers = #tpu.dot_dimension_numbers<[1], [0], [0], [1], [0, 0, 1, 1], [], []>} : vector<32x128xf32>, vector<128x64xf32>, vector<32x64xf32> -> vector<32x64xf32>
    %cst_7 = arith.constant dense<0.000000e+00> : vector<32xf32>
    %9 = vector.multi_reduction <add>, %8, %cst_7 [1] : vector<32x64xf32> to vector<32xf32>
    %10 = vector.shape_cast %9 : vector<32xf32> to vector<32x1xf32>
    %11 = arith.addf %3, %10 : vector<32x1xf32>
    %12 = arith.mulf %8, %8 : vector<32x64xf32>
    %cst_8 = arith.constant dense<0.000000e+00> : vector<32xf32>
    %13 = vector.multi_reduction <add>, %12, %cst_8 [1] : vector<32x64xf32> to vector<32xf32>
    %14 = vector.shape_cast %13 : vector<32xf32> to vector<32x1xf32>
    %15 = arith.addf %4, %14 : vector<32x1xf32>
    %c0_9 = arith.constant 0 : index
    %c0_10 = arith.constant 0 : index
    %16 = vector.load %arg3[%c0_9, %c0_10] : memref<32x128xf32, #tpu.memory_space<vmem>>, vector<32x128xf32>
    %c1 = arith.constant 1 : index
    %c0_11 = arith.constant 0 : index
    %c0_12 = arith.constant 0 : index
    %17 = vector.load %arg2[%c1, %c0_11, %c0_12] : memref<2x128x64xf32, #tpu.memory_space<vmem>>, vector<1x128x64xf32>
    %18 = vector.shape_cast %17 : vector<1x128x64xf32> to vector<128x64xf32>
    %cst_13 = arith.constant dense<0.000000e+00> : vector<32x64xf32>
    %19 = tpu.matmul %16, %18, %cst_13 {dimension_numbers = #tpu.dot_dimension_numbers<[1], [0], [0], [1], [0, 0, 1, 1], [], []>} : vector<32x128xf32>, vector<128x64xf32>, vector<32x64xf32> -> vector<32x64xf32>
    %cst_14 = arith.constant dense<0.000000e+00> : vector<32xf32>
    %20 = vector.multi_reduction <add>, %19, %cst_14 [1] : vector<32x64xf32> to vector<32xf32>
    %21 = vector.shape_cast %20 : vector<32xf32> to vector<32x1xf32>
    %22 = arith.addf %11, %21 : vector<32x1xf32>
    %23 = arith.mulf %19, %19 : vector<32x64xf32>
    %cst_15 = arith.constant dense<0.000000e+00> : vector<32xf32>
    %24 = vector.multi_reduction <add>, %23, %cst_15 [1] : vector<32x64xf32> to vector<32xf32>
    %25 = vector.shape_cast %24 : vector<32xf32> to vector<32x1xf32>
    %26 = arith.addf %15, %25 : vector<32x1xf32>
    %c0_16 = arith.constant 0 : index
    %c0_17 = arith.constant 0 : index
    %c0_18 = arith.constant 0 : index
    %27 = vector.load %arg4[%c0_16, %c0_17, %c0_18] : memref<1x32x1xf32, #tpu.memory_space<vmem>>, vector<1x32x1xf32>
    %28 = vector.shape_cast %27 : vector<1x32x1xf32> to vector<32x1xf32>
    %29 = arith.addf %28, %22 : vector<32x1xf32>
    %c0_19 = arith.constant 0 : index
    %c0_20 = arith.constant 0 : index
    %c0_21 = arith.constant 0 : index
    %30 = vector.load %arg4[%c0_19, %c0_20, %c0_21] : memref<1x32x1xf32, #tpu.memory_space<vmem>>, vector<1x32x1xf32>
    %31 = vector.shape_cast %30 : vector<1x32x1xf32> to vector<32x1xf32>
    %32 = vector.shape_cast %29 : vector<32x1xf32> to vector<1x32x1xf32>
    tpu.vector_store %arg4[%c0_19, %c0_20, %c0_21], %32 {strides = array<i32>} : memref<1x32x1xf32, #tpu.memory_space<vmem>>, vector<1x32x1xf32>,
    %c0_22 = arith.constant 0 : index
    %c0_23 = arith.constant 0 : index
    %c0_24 = arith.constant 0 : index
    %33 = vector.load %arg5[%c0_22, %c0_23, %c0_24] : memref<1x32x1xf32, #tpu.memory_space<vmem>>, vector<1x32x1xf32>
    %34 = vector.shape_cast %33 : vector<1x32x1xf32> to vector<32x1xf32>
    %35 = arith.addf %34, %26 : vector<32x1xf32>
    %c0_25 = arith.constant 0 : index
    %c0_26 = arith.constant 0 : index
    %c0_27 = arith.constant 0 : index
    %36 = vector.load %arg5[%c0_25, %c0_26, %c0_27] : memref<1x32x1xf32, #tpu.memory_space<vmem>>, vector<1x32x1xf32>
    %37 = vector.shape_cast %36 : vector<1x32x1xf32> to vector<32x1xf32>
    %38 = vector.shape_cast %35 : vector<32x1xf32> to vector<1x32x1xf32>
    tpu.vector_store %arg5[%c0_25, %c0_26, %c0_27], %38 {strides = array<i32>} : memref<1x32x1xf32, #tpu.memory_space<vmem>>, vector<1x32x1xf32>,
    return
  }
  func.func @transform_0(%arg0: i32, %arg1: i32) -> (i32, i32, i32) {
    %c0_i32 = arith.constant 0 : i32
    %c0_i32_0 = arith.constant 0 : i32
    return %arg0, %c0_i32, %arg1 : i32, i32, i32
  }
  func.func @transform_1(%arg0: i32, %arg1: i32) -> (i32, i32) {
    %c0_i32 = arith.constant 0 : i32
    %c0_i32_0 = arith.constant 0 : i32
    %c0_i32_1 = arith.constant 0 : i32
    return %c0_i32, %c0_i32_0 : i32, i32
  }
  func.func @transform_2(%arg0: i32, %arg1: i32) -> (i32, i32, i32) {
    %c0_i32 = arith.constant 0 : i32
    %c0_i32_0 = arith.constant 0 : i32
    %c0_i32_1 = arith.constant 0 : i32
    return %arg0, %c0_i32, %c0_i32_0 : i32, i32, i32
  }
  func.func @transform_3(%arg0: i32, %arg1: i32) -> (i32, i32, i32) {
    %c0_i32 = arith.constant 0 : i32
    %c0_i32_0 = arith.constant 0 : i32
    %c0_i32_1 = arith.constant 0 : i32
    return %arg0, %c0_i32, %c0_i32_0 : i32, i32, i32
  }
}

module attributes {stable_mosaic.version = 11 : i64} {
  func.func @_stats2_kernel(%arg0: i32, %arg1: i32, %arg2: memref<2x128x64xf32, #tpu.memory_space<vmem>>, %arg3: memref<32x128xf32, #tpu.memory_space<vmem>>, %arg4: memref<32x1xf32, #tpu.memory_space<vmem>>, %arg5: memref<128x32xf32, #tpu.memory_space<vmem>>, %arg6: memref<1x128x1xf32, #tpu.memory_space<vmem>>, %arg7: memref<1x128x1xf32, #tpu.memory_space<vmem>>) attributes {dimension_semantics = [#tpu.dimension_semantics<parallel>, #tpu.dimension_semantics<arbitrary>], iteration_bounds = array<i64: 1, 1>, scalar_prefetch = 0 : i64, scratch_operands = 0 : i64, tpu.core_type = #tpu.core_type<tc>, window_params = [{transform_indices = @transform_0, window_bounds = array<i64: 2, 128, 64>}, {pipeline_mode = #tpu.pipeline_mode<synchronous>, transform_indices = @transform_1, window_bounds = array<i64: 32, 128>}, {pipeline_mode = #tpu.pipeline_mode<synchronous>, transform_indices = @transform_2, window_bounds = array<i64: 32, 1>}, {pipeline_mode = #tpu.pipeline_mode<synchronous>, transform_indices = @transform_3, window_bounds = array<i64: 128, 32>}, {transform_indices = @transform_4, window_bounds = array<i64: 1, 128, 1>}, {transform_indices = @transform_5, window_bounds = array<i64: 1, 128, 1>}]} {
    %c0_i32 = arith.constant 0 : i32
    %0 = arith.cmpi eq, %arg1, %c0_i32 : i32
    %1 = arith.extui %0 : i1 to i32
    %c0_i32_0 = arith.constant 0 : i32
    %2 = arith.cmpi ne, %1, %c0_i32_0 : i32
    scf.if %2 {
      %cst_40 = arith.constant 0.000000e+00 : f32
      %53 = vector.broadcast %cst_40 : f32 to vector<1x128x1xf32>
      %c0_41 = arith.constant 0 : index
      %c0_42 = arith.constant 0 : index
      %c0_43 = arith.constant 0 : index
      %54 = vector.load %arg6[%c0_41, %c0_42, %c0_43] : memref<1x128x1xf32, #tpu.memory_space<vmem>>, vector<1x128x1xf32>
      tpu.vector_store %arg6[%c0_41, %c0_42, %c0_43], %53 {strides = array<i32>} : memref<1x128x1xf32, #tpu.memory_space<vmem>>, vector<1x128x1xf32>,
      %cst_44 = arith.constant 0.000000e+00 : f32
      %55 = vector.broadcast %cst_44 : f32 to vector<1x128x1xf32>
      %c0_45 = arith.constant 0 : index
      %c0_46 = arith.constant 0 : index
      %c0_47 = arith.constant 0 : index
      %56 = vector.load %arg7[%c0_45, %c0_46, %c0_47] : memref<1x128x1xf32, #tpu.memory_space<vmem>>, vector<1x128x1xf32>
      tpu.vector_store %arg7[%c0_45, %c0_46, %c0_47], %55 {strides = array<i32>} : memref<1x128x1xf32, #tpu.memory_space<vmem>>, vector<1x128x1xf32>,
    } else {
    }
    %cst = arith.constant 0.000000e+00 : f32
    %3 = vector.broadcast %cst : f32 to vector<128x1xf32>
    %cst_1 = arith.constant 0.000000e+00 : f32
    %4 = vector.broadcast %cst_1 : f32 to vector<128x1xf32>
    %c0 = arith.constant 0 : index
    %c0_2 = arith.constant 0 : index
    %c0_3 = arith.constant 0 : index
    %5 = vector.load %arg2[%c0, %c0_2, %c0_3] : memref<2x128x64xf32, #tpu.memory_space<vmem>>, vector<1x128x64xf32>
    %6 = vector.shape_cast %5 : vector<1x128x64xf32> to vector<128x64xf32>
    %c0_4 = arith.constant 0 : index
    %c0_5 = arith.constant 0 : index
    %7 = vector.load %arg3[%c0_4, %c0_5] : memref<32x128xf32, #tpu.memory_space<vmem>>, vector<32x128xf32>
    %cst_6 = arith.constant dense<0.000000e+00> : vector<32x64xf32>
    %8 = tpu.matmul %7, %6, %cst_6 {dimension_numbers = #tpu.dot_dimension_numbers<[1], [0], [0], [1], [0, 0, 1, 1], [], []>} : vector<32x128xf32>, vector<128x64xf32>, vector<32x64xf32> -> vector<32x64xf32>
    %c0_7 = arith.constant 0 : index
    %c0_8 = arith.constant 0 : index
    %9 = vector.load %arg4[%c0_7, %c0_8] : memref<32x1xf32, #tpu.memory_space<vmem>>, vector<32x1xf32>
    %10 = vector.broadcast %9 : vector<32x1xf32> to vector<32x64xf32>
    %11 = arith.addf %8, %10 : vector<32x64xf32>
    %cst_9 = arith.constant 0.000000e+00 : f32
    %12 = vector.broadcast %cst_9 : f32 to vector<32x64xf32>
    %13 = arith.maximumf %11, %12 : vector<32x64xf32>
    %c0_10 = arith.constant 0 : index
    %c0_11 = arith.constant 0 : index
    %14 = vector.load %arg5[%c0_10, %c0_11] : memref<128x32xf32, #tpu.memory_space<vmem>>, vector<128x32xf32>
    %cst_12 = arith.constant dense<0.000000e+00> : vector<128x64xf32>
    %15 = tpu.matmul %14, %13, %cst_12 {dimension_numbers = #tpu.dot_dimension_numbers<[1], [0], [0], [1], [0, 0, 1, 1], [], []>} : vector<128x32xf32>, vector<32x64xf32>, vector<128x64xf32> -> vector<128x64xf32>
    %cst_13 = arith.constant dense<0.000000e+00> : vector<128xf32>
    %16 = vector.multi_reduction <add>, %15, %cst_13 [1] : vector<128x64xf32> to vector<128xf32>
    %17 = vector.shape_cast %16 : vector<128xf32> to vector<128x1xf32>
    %18 = arith.addf %3, %17 : vector<128x1xf32>
    %19 = arith.mulf %15, %15 : vector<128x64xf32>
    %cst_14 = arith.constant dense<0.000000e+00> : vector<128xf32>
    %20 = vector.multi_reduction <add>, %19, %cst_14 [1] : vector<128x64xf32> to vector<128xf32>
    %21 = vector.shape_cast %20 : vector<128xf32> to vector<128x1xf32>
    %22 = arith.addf %4, %21 : vector<128x1xf32>
    %c1 = arith.constant 1 : index
    %c0_15 = arith.constant 0 : index
    %c0_16 = arith.constant 0 : index
    %23 = vector.load %arg2[%c1, %c0_15, %c0_16] : memref<2x128x64xf32, #tpu.memory_space<vmem>>, vector<1x128x64xf32>
    %24 = vector.shape_cast %23 : vector<1x128x64xf32> to vector<128x64xf32>
    %c0_17 = arith.constant 0 : index
    %c0_18 = arith.constant 0 : index
    %25 = vector.load %arg3[%c0_17, %c0_18] : memref<32x128xf32, #tpu.memory_space<vmem>>, vector<32x128xf32>
    %cst_19 = arith.constant dense<0.000000e+00> : vector<32x64xf32>
    %26 = tpu.matmul %25, %24, %cst_19 {dimension_numbers = #tpu.dot_dimension_numbers<[1], [0], [0], [1], [0, 0, 1, 1], [], []>} : vector<32x128xf32>, vector<128x64xf32>, vector<32x64xf32> -> vector<32x64xf32>
    %c0_20 = arith.constant 0 : index
    %c0_21 = arith.constant 0 : index
    %27 = vector.load %arg4[%c0_20, %c0_21] : memref<32x1xf32, #tpu.memory_space<vmem>>, vector<32x1xf32>
    %28 = vector.broadcast %27 : vector<32x1xf32> to vector<32x64xf32>
    %29 = arith.addf %26, %28 : vector<32x64xf32>
    %cst_22 = arith.constant 0.000000e+00 : f32
    %30 = vector.broadcast %cst_22 : f32 to vector<32x64xf32>
    %31 = arith.maximumf %29, %30 : vector<32x64xf32>
    %c0_23 = arith.constant 0 : index
    %c0_24 = arith.constant 0 : index
    %32 = vector.load %arg5[%c0_23, %c0_24] : memref<128x32xf32, #tpu.memory_space<vmem>>, vector<128x32xf32>
    %cst_25 = arith.constant dense<0.000000e+00> : vector<128x64xf32>
    %33 = tpu.matmul %32, %31, %cst_25 {dimension_numbers = #tpu.dot_dimension_numbers<[1], [0], [0], [1], [0, 0, 1, 1], [], []>} : vector<128x32xf32>, vector<32x64xf32>, vector<128x64xf32> -> vector<128x64xf32>
    %cst_26 = arith.constant dense<0.000000e+00> : vector<128xf32>
    %34 = vector.multi_reduction <add>, %33, %cst_26 [1] : vector<128x64xf32> to vector<128xf32>
    %35 = vector.shape_cast %34 : vector<128xf32> to vector<128x1xf32>
    %36 = arith.addf %18, %35 : vector<128x1xf32>
    %37 = arith.mulf %33, %33 : vector<128x64xf32>
    %cst_27 = arith.constant dense<0.000000e+00> : vector<128xf32>
    %38 = vector.multi_reduction <add>, %37, %cst_27 [1] : vector<128x64xf32> to vector<128xf32>
    %39 = vector.shape_cast %38 : vector<128xf32> to vector<128x1xf32>
    %40 = arith.addf %22, %39 : vector<128x1xf32>
    %c0_28 = arith.constant 0 : index
    %c0_29 = arith.constant 0 : index
    %c0_30 = arith.constant 0 : index
    %41 = vector.load %arg6[%c0_28, %c0_29, %c0_30] : memref<1x128x1xf32, #tpu.memory_space<vmem>>, vector<1x128x1xf32>
    %42 = vector.shape_cast %41 : vector<1x128x1xf32> to vector<128x1xf32>
    %43 = arith.addf %42, %36 : vector<128x1xf32>
    %c0_31 = arith.constant 0 : index
    %c0_32 = arith.constant 0 : index
    %c0_33 = arith.constant 0 : index
    %44 = vector.load %arg6[%c0_31, %c0_32, %c0_33] : memref<1x128x1xf32, #tpu.memory_space<vmem>>, vector<1x128x1xf32>
    %45 = vector.shape_cast %44 : vector<1x128x1xf32> to vector<128x1xf32>
    %46 = vector.shape_cast %43 : vector<128x1xf32> to vector<1x128x1xf32>
    tpu.vector_store %arg6[%c0_31, %c0_32, %c0_33], %46 {strides = array<i32>} : memref<1x128x1xf32, #tpu.memory_space<vmem>>, vector<1x128x1xf32>,
    %c0_34 = arith.constant 0 : index
    %c0_35 = arith.constant 0 : index
    %c0_36 = arith.constant 0 : index
    %47 = vector.load %arg7[%c0_34, %c0_35, %c0_36] : memref<1x128x1xf32, #tpu.memory_space<vmem>>, vector<1x128x1xf32>
    %48 = vector.shape_cast %47 : vector<1x128x1xf32> to vector<128x1xf32>
    %49 = arith.addf %48, %40 : vector<128x1xf32>
    %c0_37 = arith.constant 0 : index
    %c0_38 = arith.constant 0 : index
    %c0_39 = arith.constant 0 : index
    %50 = vector.load %arg7[%c0_37, %c0_38, %c0_39] : memref<1x128x1xf32, #tpu.memory_space<vmem>>, vector<1x128x1xf32>
    %51 = vector.shape_cast %50 : vector<1x128x1xf32> to vector<128x1xf32>
    %52 = vector.shape_cast %49 : vector<128x1xf32> to vector<1x128x1xf32>
    tpu.vector_store %arg7[%c0_37, %c0_38, %c0_39], %52 {strides = array<i32>} : memref<1x128x1xf32, #tpu.memory_space<vmem>>, vector<1x128x1xf32>,
    return
  }
  func.func @transform_0(%arg0: i32, %arg1: i32) -> (i32, i32, i32) {
    %c0_i32 = arith.constant 0 : i32
    %c0_i32_0 = arith.constant 0 : i32
    return %arg0, %c0_i32, %arg1 : i32, i32, i32
  }
  func.func @transform_1(%arg0: i32, %arg1: i32) -> (i32, i32) {
    %c0_i32 = arith.constant 0 : i32
    %c0_i32_0 = arith.constant 0 : i32
    %c0_i32_1 = arith.constant 0 : i32
    return %c0_i32, %c0_i32_0 : i32, i32
  }
  func.func @transform_2(%arg0: i32, %arg1: i32) -> (i32, i32) {
    %c0_i32 = arith.constant 0 : i32
    %c0_i32_0 = arith.constant 0 : i32
    %c0_i32_1 = arith.constant 0 : i32
    return %c0_i32, %c0_i32_0 : i32, i32
  }
  func.func @transform_3(%arg0: i32, %arg1: i32) -> (i32, i32) {
    %c0_i32 = arith.constant 0 : i32
    %c0_i32_0 = arith.constant 0 : i32
    %c0_i32_1 = arith.constant 0 : i32
    return %c0_i32, %c0_i32_0 : i32, i32
  }
  func.func @transform_4(%arg0: i32, %arg1: i32) -> (i32, i32, i32) {
    %c0_i32 = arith.constant 0 : i32
    %c0_i32_0 = arith.constant 0 : i32
    %c0_i32_1 = arith.constant 0 : i32
    return %arg0, %c0_i32, %c0_i32_0 : i32, i32, i32
  }
  func.func @transform_5(%arg0: i32, %arg1: i32) -> (i32, i32, i32) {
    %c0_i32 = arith.constant 0 : i32
    %c0_i32_0 = arith.constant 0 : i32
    %c0_i32_1 = arith.constant 0 : i32
    return %arg0, %c0_i32, %c0_i32_0 : i32, i32, i32
  }
}

module attributes {stable_mosaic.version = 11 : i64} {
  func.func @_apply_kernel(%arg0: i32, %arg1: i32, %arg2: memref<2x128x64xf32, #tpu.memory_space<vmem>>, %arg3: memref<32x128xf32, #tpu.memory_space<vmem>>, %arg4: memref<32x1xf32, #tpu.memory_space<vmem>>, %arg5: memref<128x32xf32, #tpu.memory_space<vmem>>, %arg6: memref<128x1xf32, #tpu.memory_space<vmem>>, %arg7: memref<2x128x64xf32, #tpu.memory_space<vmem>>) attributes {dimension_semantics = [#tpu.dimension_semantics<parallel>, #tpu.dimension_semantics<parallel>], iteration_bounds = array<i64: 1, 1>, scalar_prefetch = 0 : i64, scratch_operands = 0 : i64, tpu.core_type = #tpu.core_type<tc>, window_params = [{transform_indices = @transform_0, window_bounds = array<i64: 2, 128, 64>}, {pipeline_mode = #tpu.pipeline_mode<synchronous>, transform_indices = @transform_1, window_bounds = array<i64: 32, 128>}, {pipeline_mode = #tpu.pipeline_mode<synchronous>, transform_indices = @transform_2, window_bounds = array<i64: 32, 1>}, {pipeline_mode = #tpu.pipeline_mode<synchronous>, transform_indices = @transform_3, window_bounds = array<i64: 128, 32>}, {pipeline_mode = #tpu.pipeline_mode<synchronous>, transform_indices = @transform_4, window_bounds = array<i64: 128, 1>}, {transform_indices = @transform_5, window_bounds = array<i64: 2, 128, 64>}]} {
    %c0 = arith.constant 0 : index
    %c0_0 = arith.constant 0 : index
    %c0_1 = arith.constant 0 : index
    %0 = vector.load %arg2[%c0, %c0_0, %c0_1] : memref<2x128x64xf32, #tpu.memory_space<vmem>>, vector<1x128x64xf32>
    %1 = vector.shape_cast %0 : vector<1x128x64xf32> to vector<128x64xf32>
    %c0_2 = arith.constant 0 : index
    %c0_3 = arith.constant 0 : index
    %2 = vector.load %arg3[%c0_2, %c0_3] : memref<32x128xf32, #tpu.memory_space<vmem>>, vector<32x128xf32>
    %cst = arith.constant dense<0.000000e+00> : vector<32x64xf32>
    %3 = tpu.matmul %2, %1, %cst {dimension_numbers = #tpu.dot_dimension_numbers<[1], [0], [0], [1], [0, 0, 1, 1], [], []>} : vector<32x128xf32>, vector<128x64xf32>, vector<32x64xf32> -> vector<32x64xf32>
    %c0_4 = arith.constant 0 : index
    %c0_5 = arith.constant 0 : index
    %4 = vector.load %arg4[%c0_4, %c0_5] : memref<32x1xf32, #tpu.memory_space<vmem>>, vector<32x1xf32>
    %5 = vector.broadcast %4 : vector<32x1xf32> to vector<32x64xf32>
    %6 = arith.addf %3, %5 : vector<32x64xf32>
    %cst_6 = arith.constant 0.000000e+00 : f32
    %7 = vector.broadcast %cst_6 : f32 to vector<32x64xf32>
    %8 = arith.maximumf %6, %7 : vector<32x64xf32>
    %c0_7 = arith.constant 0 : index
    %c0_8 = arith.constant 0 : index
    %9 = vector.load %arg5[%c0_7, %c0_8] : memref<128x32xf32, #tpu.memory_space<vmem>>, vector<128x32xf32>
    %cst_9 = arith.constant dense<0.000000e+00> : vector<128x64xf32>
    %10 = tpu.matmul %9, %8, %cst_9 {dimension_numbers = #tpu.dot_dimension_numbers<[1], [0], [0], [1], [0, 0, 1, 1], [], []>} : vector<128x32xf32>, vector<32x64xf32>, vector<128x64xf32> -> vector<128x64xf32>
    %c0_10 = arith.constant 0 : index
    %c0_11 = arith.constant 0 : index
    %11 = vector.load %arg6[%c0_10, %c0_11] : memref<128x1xf32, #tpu.memory_space<vmem>>, vector<128x1xf32>
    %12 = vector.broadcast %11 : vector<128x1xf32> to vector<128x64xf32>
    %13 = arith.addf %10, %12 : vector<128x64xf32>
    %14 = arith.addf %13, %1 : vector<128x64xf32>
    %cst_12 = arith.constant 0.000000e+00 : f32
    %15 = vector.broadcast %cst_12 : f32 to vector<128x64xf32>
    %16 = arith.maximumf %14, %15 : vector<128x64xf32>
    %c0_13 = arith.constant 0 : index
    %c0_14 = arith.constant 0 : index
    %c0_15 = arith.constant 0 : index
    %17 = vector.load %arg7[%c0_13, %c0_14, %c0_15] : memref<2x128x64xf32, #tpu.memory_space<vmem>>, vector<1x128x64xf32>
    %18 = vector.shape_cast %17 : vector<1x128x64xf32> to vector<128x64xf32>
    %19 = vector.shape_cast %16 : vector<128x64xf32> to vector<1x128x64xf32>
    tpu.vector_store %arg7[%c0_13, %c0_14, %c0_15], %19 {strides = array<i32>} : memref<2x128x64xf32, #tpu.memory_space<vmem>>, vector<1x128x64xf32>,
    %c1 = arith.constant 1 : index
    %c0_16 = arith.constant 0 : index
    %c0_17 = arith.constant 0 : index
    %20 = vector.load %arg2[%c1, %c0_16, %c0_17] : memref<2x128x64xf32, #tpu.memory_space<vmem>>, vector<1x128x64xf32>
    %21 = vector.shape_cast %20 : vector<1x128x64xf32> to vector<128x64xf32>
    %c0_18 = arith.constant 0 : index
    %c0_19 = arith.constant 0 : index
    %22 = vector.load %arg3[%c0_18, %c0_19] : memref<32x128xf32, #tpu.memory_space<vmem>>, vector<32x128xf32>
    %cst_20 = arith.constant dense<0.000000e+00> : vector<32x64xf32>
    %23 = tpu.matmul %22, %21, %cst_20 {dimension_numbers = #tpu.dot_dimension_numbers<[1], [0], [0], [1], [0, 0, 1, 1], [], []>} : vector<32x128xf32>, vector<128x64xf32>, vector<32x64xf32> -> vector<32x64xf32>
    %c0_21 = arith.constant 0 : index
    %c0_22 = arith.constant 0 : index
    %24 = vector.load %arg4[%c0_21, %c0_22] : memref<32x1xf32, #tpu.memory_space<vmem>>, vector<32x1xf32>
    %25 = vector.broadcast %24 : vector<32x1xf32> to vector<32x64xf32>
    %26 = arith.addf %23, %25 : vector<32x64xf32>
    %cst_23 = arith.constant 0.000000e+00 : f32
    %27 = vector.broadcast %cst_23 : f32 to vector<32x64xf32>
    %28 = arith.maximumf %26, %27 : vector<32x64xf32>
    %c0_24 = arith.constant 0 : index
    %c0_25 = arith.constant 0 : index
    %29 = vector.load %arg5[%c0_24, %c0_25] : memref<128x32xf32, #tpu.memory_space<vmem>>, vector<128x32xf32>
    %cst_26 = arith.constant dense<0.000000e+00> : vector<128x64xf32>
    %30 = tpu.matmul %29, %28, %cst_26 {dimension_numbers = #tpu.dot_dimension_numbers<[1], [0], [0], [1], [0, 0, 1, 1], [], []>} : vector<128x32xf32>, vector<32x64xf32>, vector<128x64xf32> -> vector<128x64xf32>
    %c0_27 = arith.constant 0 : index
    %c0_28 = arith.constant 0 : index
    %31 = vector.load %arg6[%c0_27, %c0_28] : memref<128x1xf32, #tpu.memory_space<vmem>>, vector<128x1xf32>
    %32 = vector.broadcast %31 : vector<128x1xf32> to vector<128x64xf32>
    %33 = arith.addf %30, %32 : vector<128x64xf32>
    %34 = arith.addf %33, %21 : vector<128x64xf32>
    %cst_29 = arith.constant 0.000000e+00 : f32
    %35 = vector.broadcast %cst_29 : f32 to vector<128x64xf32>
    %36 = arith.maximumf %34, %35 : vector<128x64xf32>
    %c1_30 = arith.constant 1 : index
    %c0_31 = arith.constant 0 : index
    %c0_32 = arith.constant 0 : index
    %37 = vector.load %arg7[%c1_30, %c0_31, %c0_32] : memref<2x128x64xf32, #tpu.memory_space<vmem>>, vector<1x128x64xf32>
    %38 = vector.shape_cast %37 : vector<1x128x64xf32> to vector<128x64xf32>
    %39 = vector.shape_cast %36 : vector<128x64xf32> to vector<1x128x64xf32>
    tpu.vector_store %arg7[%c1_30, %c0_31, %c0_32], %39 {strides = array<i32>} : memref<2x128x64xf32, #tpu.memory_space<vmem>>, vector<1x128x64xf32>,
    return
  }
  func.func @transform_0(%arg0: i32, %arg1: i32) -> (i32, i32, i32) {
    %c0_i32 = arith.constant 0 : i32
    %c0_i32_0 = arith.constant 0 : i32
    return %arg0, %c0_i32, %arg1 : i32, i32, i32
  }
  func.func @transform_1(%arg0: i32, %arg1: i32) -> (i32, i32) {
    %c0_i32 = arith.constant 0 : i32
    %c0_i32_0 = arith.constant 0 : i32
    %c0_i32_1 = arith.constant 0 : i32
    return %c0_i32, %c0_i32_0 : i32, i32
  }
  func.func @transform_2(%arg0: i32, %arg1: i32) -> (i32, i32) {
    %c0_i32 = arith.constant 0 : i32
    %c0_i32_0 = arith.constant 0 : i32
    %c0_i32_1 = arith.constant 0 : i32
    return %c0_i32, %c0_i32_0 : i32, i32
  }
  func.func @transform_3(%arg0: i32, %arg1: i32) -> (i32, i32) {
    %c0_i32 = arith.constant 0 : i32
    %c0_i32_0 = arith.constant 0 : i32
    %c0_i32_1 = arith.constant 0 : i32
    return %c0_i32, %c0_i32_0 : i32, i32
  }
  func.func @transform_4(%arg0: i32, %arg1: i32) -> (i32, i32) {
    %c0_i32 = arith.constant 0 : i32
    %c0_i32_0 = arith.constant 0 : i32
    %c0_i32_1 = arith.constant 0 : i32
    return %c0_i32, %c0_i32_0 : i32, i32
  }
  func.func @transform_5(%arg0: i32, %arg1: i32) -> (i32, i32, i32) {
    %c0_i32 = arith.constant 0 : i32
    %c0_i32_0 = arith.constant 0 : i32
    return %arg0, %c0_i32, %arg1 : i32, i32, i32
  }
}

</mosaic_0001>

<llo_original>
// kernel: resblock_forward.3
$region0: #{resblock_forward.3}
  #allocation0 [shape = 'u32[]', space=smem, size = 0x4, offset = 0x4, fixed_abs, tag = 'smem constant byte address 0x4 - core index']
  #allocation1 [shape = 'u32[144,128]{1,0:T(1,128)}', space=vmem, size = 0x12000, scoped, tag = 'internal scratch']
  %s0 = inlined_call_operand.vmem [shape: f32[2,128,64], index: 0, kind: input, shape index: {}]
  %s1 = inlined_call_operand.vmem [shape: f32[32,128], index: 1, kind: input, shape index: {}]
  %s2 = inlined_call_operand.vmem [shape: f32[1,32,1], index: 2, kind: output, shape index: {0}]
  %s3 = inlined_call_operand.vmem [shape: f32[1,32,1], index: 3, kind: output, shape index: {1}]
  %4 = xla_tuple %s2, %s3
  %s5 = sld [smem:[#allocation0]]
  $region30: #{resblock_forward.3} parent=0
    _
  %s7 = ssub.s32 1, %s5
  %s8 = scalar_select 0, %s7, %s5
  // Predicated region
  $region2: #{resblock_forward.3} parent=0 // pred_check
    _
  $region3: #{resblock_forward.3} parent=0 // pred_check_branch
    %10 = sbr.rel (0) target = $region5
  $region4: #{resblock_forward.3} parent=0 // pred_region
    _
  $region5: #{resblock_forward.3} parent=0 // pred_fallthru
    _
  // Predicated region
  $region6: #{resblock_forward.3} parent=0 // pred_check
    _
  $region7: #{resblock_forward.3} parent=0 // pred_check_branch
    %12 = sbr.rel (0) target = $region9
  $region8: #{resblock_forward.3} parent=0 // pred_region
    _
  $region9: #{resblock_forward.3} parent=0 // pred_fallthru
    _
  %p13 = scmp.eq.s32.totalorder 0, 0
  // Predicated region
  $region10: #{resblock_forward.3} parent=0 // pred_check
    %p14 = pneg %p13
  $region11: #{resblock_forward.3} parent=0 // pred_check_branch
    %16 = sbr.rel (%p14) target = $region13
  $region12: #{resblock_forward.3} parent=0 // pred_region
    %vm17 = vcmask 7168
    %18 = vst.msk [vmem:[%s2] sm:$0xff] %vm17, 0.0
    %19 = vst.msk [vmem:[%s2 + $0x8] sm:$0xff] %vm17, 0.0
    %20 = vst.msk [vmem:[%s2 + $0x10] sm:$0xff] %vm17, 0.0
    %21 = vst.msk [vmem:[%s2 + $0x18] sm:$0xff] %vm17, 0.0
    %22 = vst.msk [vmem:[%s3] sm:$0xff] %vm17, 0.0
    %23 = vst.msk [vmem:[%s3 + $0x8] sm:$0xff] %vm17, 0.0
    %24 = vst.msk [vmem:[%s3 + $0x10] sm:$0xff] %vm17, 0.0
    %25 = vst.msk [vmem:[%s3 + $0x18] sm:$0xff] %vm17, 0.0
  $region13: #{resblock_forward.3} parent=0 // pred_fallthru
    _
  %v26 = vld [vmem:[%s1] sm:$0xff]
  %v27 = vld [vmem:[%s1 + $0x8] sm:$0xff]
  %v28 = vld [vmem:[%s1 + $0x10] sm:$0xff]
  %v29 = vld [vmem:[%s1 + $0x18] sm:$0xff]
  %v30 = vld [vmem:[%s0] sm:$0xff]
  %v31 = vld [vmem:[%s0 + $0x8] sm:$0xff]
  %v32 = vld [vmem:[%s0 + $0x10] sm:$0xff]
  %v33 = vld [vmem:[%s0 + $0x18] sm:$0xff]
  %v34 = vld [vmem:[%s0 + $0x20] sm:$0xff]
  %v35 = vld [vmem:[%s0 + $0x28] sm:$0xff]
  %v36 = vld [vmem:[%s0 + $0x30] sm:$0xff]
  %v37 = vld [vmem:[%s0 + $0x38] sm:$0xff]
  %v38 = vld [vmem:[%s0 + $0x40] sm:$0xff]
  %v39 = vld [vmem:[%s0 + $0x48] sm:$0xff]
  %v40 = vld [vmem:[%s0 + $0x50] sm:$0xff]
  %v41 = vld [vmem:[%s0 + $0x58] sm:$0xff]
  %v42 = vld [vmem:[%s0 + $0x60] sm:$0xff]
  %v43 = vld [vmem:[%s0 + $0x68] sm:$0xff]
  %v44 = vld [vmem:[%s0 + $0x70] sm:$0xff]
  %v45 = vld [vmem:[%s0 + $0x78] sm:$0xff]
  %46 = vmatprep.subr.mxu0 0.0
  %47 = vmatpush1.msra.mxu0 %v45
  %48 = vmatprep.subr.mxu0 0.0
  %49 = vmatpush1.msra.mxu0 %v44
  %50 = vmatprep.subr.mxu0 0.0
  %51 = vmatpush1.msra.mxu0 %v43
  %52 = vmatprep.subr.mxu0 0.0
  %53 = vmatpush1.msra.mxu0 %v42
  %54 = vmatprep.subr.mxu0 0.0
  %55 = vmatpush1.msra.mxu0 %v41
  %56 = vmatprep.subr.mxu0 0.0
  %57 = vmatpush1.msra.mxu0 %v40
  %58 = vmatprep.subr.mxu0 0.0
  %59 = vmatpush1.msra.mxu0 %v39
  %60 = vmatprep.subr.mxu0 0.0
  %61 = vmatpush1.msra.mxu0 %v38
  %62 = vmatprep.subr.mxu0 0.0
  %63 = vmatpush1.msra.mxu0 %v37
  %64 = vmatprep.subr.mxu0 0.0
  %65 = vmatpush1.msra.mxu0 %v36
  %66 = vmatprep.subr.mxu0 0.0
  %67 = vmatpush1.msra.mxu0 %v35
  %68 = vmatprep.subr.mxu0 0.0
  %69 = vmatpush1.msra.mxu0 %v34
  %70 = vmatprep.subr.mxu0 0.0
  %71 = vmatpush1.msra.mxu0 %v33
  %72 = vmatprep.subr.mxu0 0.0
  %73 = vmatpush1.msra.mxu0 %v32
  %74 = vmatprep.subr.mxu0 0.0
  %75 = vmatpush1.msra.mxu0 %v31
  %76 = vmatprep.subr.mxu0 0.0
  %77 = vmatpush1.msra.mxu0 %v30
  %78 = vmatprep.subr.mxu0 0.0
  %79 = vmatpush2.msra.mxu0 0.0
  %80 = vmatprep.subr.mxu0 0.0
  %81 = vmatpush2.msra.mxu0 0.0
  %82 = vmatprep.subr.mxu0 0.0
  %83 = vmatpush2.msra.mxu0 0.0
  %84 = vmatprep.subr.mxu0 0.0
  %85 = vmatpush2.msra.mxu0 0.0
  %86 = vmatprep.subr.mxu0 0.0
  %87 = vmatpush2.msra.mxu0 0.0
  %88 = vmatprep.subr.mxu0 0.0
  %89 = vmatpush2.msra.mxu0 0.0
  %90 = vmatprep.subr.mxu0 0.0
  %91 = vmatpush2.msra.mxu0 0.0
  %92 = vmatprep.subr.mxu0 0.0
  %93 = vmatpush2.msra.mxu0 0.0
  %94 = vmatprep.subr.mxu0 0.0
  %95 = vmatpush2.msra.mxu0 0.0
  %96 = vmatprep.subr.mxu0 0.0
  %97 = vmatpush2.msra.mxu0 0.0
  %98 = vmatprep.subr.mxu0 0.0
  %99 = vmatpush2.msra.mxu0 0.0
  %100 = vmatprep.subr.mxu0 0.0
  %101 = vmatpush2.msra.mxu0 0.0
  %102 = vmatprep.subr.mxu0 0.0
  %103 = vmatpush2.msra.mxu0 0.0
  %104 = vmatprep.subr.mxu0 0.0
  %105 = vmatpush2.msra.mxu0 0.0
  %106 = vmatprep.subr.mxu0 0.0
  %107 = vmatpush2.msra.mxu0 0.0
  %108 = vmatprep.subr.mxu0 0.0
  %109 = vmatpush2.msra.mxu0 0.0
  %110 = vmatprep.mubr.f32.mxu0 0.0
  %111 = vmatmul.mubr.f32.gmra.mxu0 %v26
  %v112 = vpop.f32.mrf.mxu0
  %v113 = vadd.f32 0.0, %v112
  %v114 = vpop.f32.mrf.mxu0
  %115 = vmatprep.mubr.f32.mxu0 0.0
  %116 = vmatmul.mubr.f32.gmra.mxu0 %v27
  %v117 = vpop.f32.mrf.mxu0
  %v118 = vadd.f32 0.0, %v117
  %v119 = vpop.f32.mrf.mxu0
  %120 = vmatprep.mubr.f32.mxu0 0.0
  %121 = vmatmul.mubr.f32.gmra.mxu0 %v28
  %v122 = vpop.f32.mrf.mxu0
  %v123 = vadd.f32 0.0, %v122
  %v124 = vpop.f32.mrf.mxu0
  %125 = vmatprep.mubr.f32.mxu0 0.0
  %126 = vmatmul.mubr.f32.gmra.mxu0 %v29
  %v127 = vpop.f32.mrf.mxu0
  %v128 = vadd.f32 0.0, %v127
  %v129 = vpop.f32.mrf.mxu0
  %130 = vdwg.mxu0
  %vm131 = vcmask 523264
  %v132 = vsel %vm131, %v113, 0.0
  %133 = vadd.xlane.f32.xlu0 %v132
  %v134 = vpop.xlane.xlu0 %133
  %v135 = vsel %vm131, %v118, 0.0
  %136 = vadd.xlane.f32.xlu0 %v135
  %v137 = vpop.xlane.xlu0 %136
  %v138 = vsel %vm131, %v123, 0.0
  %139 = vadd.xlane.f32.xlu0 %v138
  %v140 = vpop.xlane.xlu0 %139
  %v141 = vsel %vm131, %v128, 0.0
  %142 = vadd.xlane.f32.xlu0 %v141
  %v143 = vpop.xlane.xlu0 %142
  %v144 = vadd.f32 %v134, 0.0
  %v145 = vadd.f32 %v137, 0.0
  %v146 = vadd.f32 %v140, 0.0
  %v147 = vadd.f32 %v143, 0.0
  %v148 = vmul.f32 %v113, %v113
  %v149 = vmul.f32 %v118, %v118
  %v150 = vmul.f32 %v123, %v123
  %v151 = vmul.f32 %v128, %v128
  %v152 = vsel %vm131, %v148, 0.0
  %153 = vadd.xlane.f32.xlu0 %v152
  %v154 = vpop.xlane.xlu0 %153
  %v155 = vsel %vm131, %v149, 0.0
  %156 = vadd.xlane.f32.xlu0 %v155
  %v157 = vpop.xlane.xlu0 %156
  %v158 = vsel %vm131, %v150, 0.0
  %159 = vadd.xlane.f32.xlu0 %v158
  %v160 = vpop.xlane.xlu0 %159
  %v161 = vsel %vm131, %v151, 0.0
  %162 = vadd.xlane.f32.xlu0 %v161
  %v163 = vpop.xlane.xlu0 %162
  %v164 = vadd.f32 %v154, 0.0
  %v165 = vadd.f32 %v157, 0.0
  %v166 = vadd.f32 %v160, 0.0
  %v167 = vadd.f32 %v163, 0.0
  %s168 = scalar_lea.vmem %s0, 128
  %v169 = vld [vmem:[%s168] sm:$0xff]
  %v170 = vld [vmem:[%s168 + $0x8] sm:$0xff]
  %v171 = vld [vmem:[%s168 + $0x10] sm:$0xff]
  %v172 = vld [vmem:[%s168 + $0x18] sm:$0xff]
  %v173 = vld [vmem:[%s168 + $0x20] sm:$0xff]
  %v174 = vld [vmem:[%s168 + $0x28] sm:$0xff]
  %v175 = vld [vmem:[%s168 + $0x30] sm:$0xff]
  %v176 = vld [vmem:[%s168 + $0x38] sm:$0xff]
  %v177 = vld [vmem:[%s168 + $0x40] sm:$0xff]
  %v178 = vld [vmem:[%s168 + $0x48] sm:$0xff]
  %v179 = vld [vmem:[%s168 + $0x50] sm:$0xff]
  %v180 = vld [vmem:[%s168 + $0x58] sm:$0xff]
  %v181 = vld [vmem:[%s168 + $0x60] sm:$0xff]
  %v182 = vld [vmem:[%s168 + $0x68] sm:$0xff]
  %v183 = vld [vmem:[%s168 + $0x70] sm:$0xff]
  %v184 = vld [vmem:[%s168 + $0x78] sm:$0xff]
  %185 = vmatprep.subr.mxu0 0.0
  %186 = vmatpush1.msra.mxu0 %v184
  %187 = vmatprep.subr.mxu0 0.0
  %188 = vmatpush1.msra.mxu0 %v183
  %189 = vmatprep.subr.mxu0 0.0
  %190 = vmatpush1.msra.mxu0 %v182
  %191 = vmatprep.subr.mxu0 0.0
  %192 = vmatpush1.msra.mxu0 %v181
  %193 = vmatprep.subr.mxu0 0.0
  %194 = vmatpush1.msra.mxu0 %v180
  %195 = vmatprep.subr.mxu0 0.0
  %196 = vmatpush1.msra.mxu0 %v179
  %197 = vmatprep.subr.mxu0 0.0
  %198 = vmatpush1.msra.mxu0 %v178
  %199 = vmatprep.subr.mxu0 0.0
  %200 = vmatpush1.msra.mxu0 %v177
  %201 = vmatprep.subr.mxu0 0.0
  %202 = vmatpush1.msra.mxu0 %v176
  %203 = vmatprep.subr.mxu0 0.0
  %204 = vmatpush1.msra.mxu0 %v175
  %205 = vmatprep.subr.mxu0 0.0
  %206 = vmatpush1.msra.mxu0 %v174
  %207 = vmatprep.subr.mxu0 0.0
  %208 = vmatpush1.msra.mxu0 %v173
  %209 = vmatprep.subr.mxu0 0.0
  %210 = vmatpush1.msra.mxu0 %v172
  %211 = vmatprep.subr.mxu0 0.0
  %212 = vmatpush1.msra.mxu0 %v171
  %213 = vmatprep.subr.mxu0 0.0
  %214 = vmatpush1.msra.mxu0 %v170
  %215 = vmatprep.subr.mxu0 0.0
  %216 = vmatpush1.msra.mxu0 %v169
  %217 = vmatprep.subr.mxu0 0.0
  %218 = vmatpush2.msra.mxu0 0.0
  %219 = vmatprep.subr.mxu0 0.0
  %220 = vmatpush2.msra.mxu0 0.0
  %221 = vmatprep.subr.mxu0 0.0
  %222 = vmatpush2.msra.mxu0 0.0
  %223 = vmatprep.subr.mxu0 0.0
  %224 = vmatpush2.msra.mxu0 0.0
  %225 = vmatprep.subr.mxu0 0.0
  %226 = vmatpush2.msra.mxu0 0.0
  %227 = vmatprep.subr.mxu0 0.0
  %228 = vmatpush2.msra.mxu0 0.0
  %229 = vmatprep.subr.mxu0 0.0
  %230 = vmatpush2.msra.mxu0 0.0
  %231 = vmatprep.subr.mxu0 0.0
  %232 = vmatpush2.msra.mxu0 0.0
  %233 = vmatprep.subr.mxu0 0.0
  %234 = vmatpush2.msra.mxu0 0.0
  %235 = vmatprep.subr.mxu0 0.0
  %236 = vmatpush2.msra.mxu0 0.0
  %237 = vmatprep.subr.mxu0 0.0
  %238 = vmatpush2.msra.mxu0 0.0
  %239 = vmatprep.subr.mxu0 0.0
  %240 = vmatpush2.msra.mxu0 0.0
  %241 = vmatprep.subr.mxu0 0.0
  %242 = vmatpush2.msra.mxu0 0.0
  %243 = vmatprep.subr.mxu0 0.0
  %244 = vmatpush2.msra.mxu0 0.0
  %245 = vmatprep.subr.mxu0 0.0
  %246 = vmatpush2.msra.mxu0 0.0
  %247 = vmatprep.subr.mxu0 0.0
  %248 = vmatpush2.msra.mxu0 0.0
  %249 = vmatprep.mubr.f32.mxu0 0.0
  %250 = vmatmul.mubr.f32.gmra.mxu0 %v26
  %v251 = vpop.f32.mrf.mxu0
  %v252 = vadd.f32 0.0, %v251
  %v253 = vpop.f32.mrf.mxu0
  %254 = vmatprep.mubr.f32.mxu0 0.0
  %255 = vmatmul.mubr.f32.gmra.mxu0 %v27
  %v256 = vpop.f32.mrf.mxu0
  %v257 = vadd.f32 0.0, %v256
  %v258 = vpop.f32.mrf.mxu0
  %259 = vmatprep.mubr.f32.mxu0 0.0
  %260 = vmatmul.mubr.f32.gmra.mxu0 %v28
  %v261 = vpop.f32.mrf.mxu0
  %v262 = vadd.f32 0.0, %v261
  %v263 = vpop.f32.mrf.mxu0
  %264 = vmatprep.mubr.f32.mxu0 0.0
  %265 = vmatmul.mubr.f32.gmra.mxu0 %v29
  %v266 = vpop.f32.mrf.mxu0
  %v267 = vadd.f32 0.0, %v266
  %v268 = vpop.f32.mrf.mxu0
  %269 = vdwg.mxu0
  %v270 = vsel %vm131, %v252, 0.0
  %271 = vadd.xlane.f32.xlu0 %v270
  %v272 = vpop.xlane.xlu0 %271
  %v273 = vsel %vm131, %v257, 0.0
  %274 = vadd.xlane.f32.xlu0 %v273
  %v275 = vpop.xlane.xlu0 %274
  %v276 = vsel %vm131, %v262, 0.0
  %277 = vadd.xlane.f32.xlu0 %v276
  %v278 = vpop.xlane.xlu0 %277
  %v279 = vsel %vm131, %v267, 0.0
  %280 = vadd.xlane.f32.xlu0 %v279
  %v281 = vpop.xlane.xlu0 %280
  %v282 = vadd.f32 %v144, %v272
  %v283 = vadd.f32 %v145, %v275
  %v284 = vadd.f32 %v146, %v278
  %v285 = vadd.f32 %v147, %v281
  %v286 = vmul.f32 %v252, %v252
  %v287 = vmul.f32 %v257, %v257
  %v288 = vmul.f32 %v262, %v262
  %v289 = vmul.f32 %v267, %v267
  %v290 = vsel %vm131, %v286, 0.0
  %291 = vadd.xlane.f32.xlu0 %v290
  %v292 = vpop.xlane.xlu0 %291
  %v293 = vsel %vm131, %v287, 0.0
  %294 = vadd.xlane.f32.xlu0 %v293
  %v295 = vpop.xlane.xlu0 %294
  %v296 = vsel %vm131, %v288, 0.0
  %297 = vadd.xlane.f32.xlu0 %v296
  %v298 = vpop.xlane.xlu0 %297
  %v299 = vsel %vm131, %v289, 0.0
  %300 = vadd.xlane.f32.xlu0 %v299
  %v301 = vpop.xlane.xlu0 %300
  %v302 = vadd.f32 %v164, %v292
  %v303 = vadd.f32 %v165, %v295
  %v304 = vadd.f32 %v166, %v298
  %v305 = vadd.f32 %v167, %v301
  %v306 = vld [vmem:[%s2] sm:$0xff]
  %v307 = vld [vmem:[%s2 + $0x8] sm:$0xff]
  %v308 = vld [vmem:[%s2 + $0x10] sm:$0xff]
  %v309 = vld [vmem:[%s2 + $0x18] sm:$0xff]
  %v310 = vadd.f32 %v306, %v282
  %v311 = vadd.f32 %v307, %v283
  %v312 = vadd.f32 %v308, %v284
  %v313 = vadd.f32 %v309, %v285
  %vm314 = vcmask 7168
  %315 = vst.msk [vmem:[%s2] sm:$0xff] %vm314, %v310
  %316 = vst.msk [vmem:[%s2 + $0x8] sm:$0xff] %vm314, %v311
  %317 = vst.msk [vmem:[%s2 + $0x10] sm:$0xff] %vm314, %v312
  %318 = vst.msk [vmem:[%s2 + $0x18] sm:$0xff] %vm314, %v313
  %v319 = vld [vmem:[%s3] sm:$0xff]
  %v320 = vld [vmem:[%s3 + $0x8] sm:$0xff]
  %v321 = vld [vmem:[%s3 + $0x10] sm:$0xff]
  %v322 = vld [vmem:[%s3 + $0x18] sm:$0xff]
  %v323 = vadd.f32 %v319, %v302
  %v324 = vadd.f32 %v320, %v303
  %v325 = vadd.f32 %v321, %v304
  %v326 = vadd.f32 %v322, %v305
  %327 = vst.msk [vmem:[%s3] sm:$0xff] %vm314, %v323
  %328 = vst.msk [vmem:[%s3 + $0x8] sm:$0xff] %vm314, %v324
  %329 = vst.msk [vmem:[%s3 + $0x10] sm:$0xff] %vm314, %v325
  %330 = vst.msk [vmem:[%s3 + $0x18] sm:$0xff] %vm314, %v326
  // Predicated region
  $region14: #{resblock_forward.3} parent=0 // pred_check
    _
  $region15: #{resblock_forward.3} parent=0 // pred_check_branch
    %332 = sbr.rel (0) target = $region17
  $region16: #{resblock_forward.3} parent=0 // pred_region
    _
  $region17: #{resblock_forward.3} parent=0 // pred_fallthru
    _
  // Predicated region
  $region18: #{resblock_forward.3} parent=0 // pred_check
    _
  $region19: #{resblock_forward.3} parent=0 // pred_check_branch
    %334 = sbr.rel (0) target = $region21
  $region20: #{resblock_forward.3} parent=0 // pred_region
    _
  $region21: #{resblock_forward.3} parent=0 // pred_fallthru
    _
  // Predicated region
  $region22: #{resblock_forward.3} parent=0 // pred_check
    _
  $region23: #{resblock_forward.3} parent=0 // pred_check_branch
    %336 = sbr.rel (0) target = $region25
  $region24: #{resblock_forward.3} parent=0 // pred_region
    _
  $region25: #{resblock_forward.3} parent=0 // pred_fallthru
    _
  // Predicated region
  $region26: #{resblock_forward.3} parent=0 // pred_check
    _
  $region27: #{resblock_forward.3} parent=0 // pred_check_branch
    %338 = sbr.rel (0) target = $region29
  $region28: #{resblock_forward.3} parent=0 // pred_region
    _
  $region29: #{resblock_forward.3} parent=0 // pred_fallthru
    _

// kernel: resblock_forward.4
$region0: #{resblock_forward.4}
  #allocation0 [shape = 'u32[]', space=smem, size = 0x4, offset = 0x4, fixed_abs, tag = 'smem constant byte address 0x4 - core index']
  #allocation1 [shape = 'u32[144,128]{1,0:T(1,128)}', space=vmem, size = 0x12000, scoped, tag = 'internal scratch']
  %s0 = inlined_call_operand.vmem [shape: f32[2,128,64], index: 0, kind: input, shape index: {}]
  %s1 = inlined_call_operand.vmem [shape: f32[32,128], index: 1, kind: input, shape index: {}]
  %s2 = inlined_call_operand.vmem [shape: f32[32,1], index: 2, kind: input, shape index: {}]
  %s3 = inlined_call_operand.vmem [shape: f32[128,32], index: 3, kind: input, shape index: {}]
  %s4 = inlined_call_operand.vmem [shape: f32[1,128,1], index: 4, kind: output, shape index: {0}]
  %s5 = inlined_call_operand.vmem [shape: f32[1,128,1], index: 5, kind: output, shape index: {1}]
  %6 = xla_tuple %s4, %s5
  %s7 = sld [smem:[#allocation0]]
  $region38: #{resblock_forward.4} parent=0
    _
  %s9 = ssub.s32 1, %s7
  %s10 = scalar_select 0, %s9, %s7
  // Predicated region
  $region2: #{resblock_forward.4} parent=0 // pred_check
    _
  $region3: #{resblock_forward.4} parent=0 // pred_check_branch
    %12 = sbr.rel (0) target = $region5
  $region4: #{resblock_forward.4} parent=0 // pred_region
    _
  $region5: #{resblock_forward.4} parent=0 // pred_fallthru
    _
  // Predicated region
  $region6: #{resblock_forward.4} parent=0 // pred_check
    _
  $region7: #{resblock_forward.4} parent=0 // pred_check_branch
    %14 = sbr.rel (0) target = $region9
  $region8: #{resblock_forward.4} parent=0 // pred_region
    _
  $region9: #{resblock_forward.4} parent=0 // pred_fallthru
    _
  // Predicated region
  $region10: #{resblock_forward.4} parent=0 // pred_check
    _
  $region11: #{resblock_forward.4} parent=0 // pred_check_branch
    %16 = sbr.rel (0) target = $region13
  $region12: #{resblock_forward.4} parent=0 // pred_region
    _
  $region13: #{resblock_forward.4} parent=0 // pred_fallthru
    _
  // Predicated region
  $region14: #{resblock_forward.4} parent=0 // pred_check
    _
  $region15: #{resblock_forward.4} parent=0 // pred_check_branch
    %18 = sbr.rel (0) target = $region17
  $region16: #{resblock_forward.4} parent=0 // pred_region
    _
  $region17: #{resblock_forward.4} parent=0 // pred_fallthru
    _
  %p19 = scmp.eq.s32.totalorder 0, 0
  // Predicated region
  $region18: #{resblock_forward.4} parent=0 // pred_check
    %p20 = pneg %p19
  $region19: #{resblock_forward.4} parent=0 // pred_check_branch
    %22 = sbr.rel (%p20) target = $region21
  $region20: #{resblock_forward.4} parent=0 // pred_region
    %vm23 = vcmask 7168
    %24 = vst.msk [vmem:[%s4] sm:$0xff] %vm23, 0.0
    %25 = vst.msk [vmem:[%s4 + $0x8] sm:$0xff] %vm23, 0.0
    %26 = vst.msk [vmem:[%s4 + $0x10] sm:$0xff] %vm23, 0.0
    %27 = vst.msk [vmem:[%s4 + $0x18] sm:$0xff] %vm23, 0.0
    %28 = vst.msk [vmem:[%s4 + $0x20] sm:$0xff] %vm23, 0.0
    %29 = vst.msk [vmem:[%s4 + $0x28] sm:$0xff] %vm23, 0.0
    %30 = vst.msk [vmem:[%s4 + $0x30] sm:$0xff] %vm23, 0.0
    %31 = vst.msk [vmem:[%s4 + $0x38] sm:$0xff] %vm23, 0.0
    %32 = vst.msk [vmem:[%s4 + $0x40] sm:$0xff] %vm23, 0.0
    %33 = vst.msk [vmem:[%s4 + $0x48] sm:$0xff] %vm23, 0.0
    %34 = vst.msk [vmem:[%s4 + $0x50] sm:$0xff] %vm23, 0.0
    %35 = vst.msk [vmem:[%s4 + $0x58] sm:$0xff] %vm23, 0.0
    %36 = vst.msk [vmem:[%s4 + $0x60] sm:$0xff] %vm23, 0.0
    %37 = vst.msk [vmem:[%s4 + $0x68] sm:$0xff] %vm23, 0.0
    %38 = vst.msk [vmem:[%s4 + $0x70] sm:$0xff] %vm23, 0.0
    %39 = vst.msk [vmem:[%s4 + $0x78] sm:$0xff] %vm23, 0.0
    %40 = vst.msk [vmem:[%s5] sm:$0xff] %vm23, 0.0
    %41 = vst.msk [vmem:[%s5 + $0x8] sm:$0xff] %vm23, 0.0
    %42 = vst.msk [vmem:[%s5 + $0x10] sm:$0xff] %vm23, 0.0
    %43 = vst.msk [vmem:[%s5 + $0x18] sm:$0xff] %vm23, 0.0
    %44 = vst.msk [vmem:[%s5 + $0x20] sm:$0xff] %vm23, 0.0
    %45 = vst.msk [vmem:[%s5 + $0x28] sm:$0xff] %vm23, 0.0
    %46 = vst.msk [vmem:[%s5 + $0x30] sm:$0xff] %vm23, 0.0
    %47 = vst.msk [vmem:[%s5 + $0x38] sm:$0xff] %vm23, 0.0
    %48 = vst.msk [vmem:[%s5 + $0x40] sm:$0xff] %vm23, 0.0
    %49 = vst.msk [vmem:[%s5 + $0x48] sm:$0xff] %vm23, 0.0
    %50 = vst.msk [vmem:[%s5 + $0x50] sm:$0xff] %vm23, 0.0
    %51 = vst.msk [vmem:[%s5 + $0x58] sm:$0xff] %vm23, 0.0
    %52 = vst.msk [vmem:[%s5 + $0x60] sm:$0xff] %vm23, 0.0
    %53 = vst.msk [vmem:[%s5 + $0x68] sm:$0xff] %vm23, 0.0
    %54 = vst.msk [vmem:[%s5 + $0x70] sm:$0xff] %vm23, 0.0
    %55 = vst.msk [vmem:[%s5 + $0x78] sm:$0xff] %vm23, 0.0
  $region21: #{resblock_forward.4} parent=0 // pred_fallthru
    _
  %v56 = vld [vmem:[%s0] sm:$0xff]
  %v57 = vld [vmem:[%s0 + $0x8] sm:$0xff]
  %v58 = vld [vmem:[%s0 + $0x10] sm:$0xff]
  %v59 = vld [vmem:[%s0 + $0x18] sm:$0xff]
  %v60 = vld [vmem:[%s0 + $0x20] sm:$0xff]
  %v61 = vld [vmem:[%s0 + $0x28] sm:$0xff]
  %v62 = vld [vmem:[%s0 + $0x30] sm:$0xff]
  %v63 = vld [vmem:[%s0 + $0x38] sm:$0xff]
  %v64 = vld [vmem:[%s0 + $0x40] sm:$0xff]
  %v65 = vld [vmem:[%s0 + $0x48] sm:$0xff]
  %v66 = vld [vmem:[%s0 + $0x50] sm:$0xff]
  %v67 = vld [vmem:[%s0 + $0x58] sm:$0xff]
  %v68 = vld [vmem:[%s0 + $0x60] sm:$0xff]
  %v69 = vld [vmem:[%s0 + $0x68] sm:$0xff]
  %v70 = vld [vmem:[%s0 + $0x70] sm:$0xff]
  %v71 = vld [vmem:[%s0 + $0x78] sm:$0xff]
  %v72 = vld [vmem:[%s1] sm:$0xff]
  %v73 = vld [vmem:[%s1 + $0x8] sm:$0xff]
  %v74 = vld [vmem:[%s1 + $0x10] sm:$0xff]
  %v75 = vld [vmem:[%s1 + $0x18] sm:$0xff]
  %v76 = vld [vmem:[%s2] sm:$0xff]
  %v77 = vld [vmem:[%s2 + $0x8] sm:$0xff]
  %v78 = vld [vmem:[%s2 + $0x10] sm:$0xff]
  %v79 = vld [vmem:[%s2 + $0x18] sm:$0xff]
  %81 = vset.pattern.permute.xlu0 0
  %82 = vperm.xlu0 %81, %v76
  %v83 = vpop.permute.xlu0 %82
  %86 = vset.pattern.permute.xlu0 0
  %87 = vperm.xlu0 %86, %v77
  %v88 = vpop.permute.xlu0 %87
  %91 = vset.pattern.permute.xlu0 0
  %92 = vperm.xlu0 %91, %v78
  %v93 = vpop.permute.xlu0 %92
  %96 = vset.pattern.permute.xlu0 0
  %97 = vperm.xlu0 %96, %v79
  %v98 = vpop.permute.xlu0 %97
  %100 = vmatprep.subr.mxu0 0.0
  %101 = vmatpush1.msra.mxu0 %v71
  %102 = vmatprep.subr.mxu0 0.0
  %103 = vmatpush1.msra.mxu0 %v70
  %104 = vmatprep.subr.mxu0 0.0
  %105 = vmatpush1.msra.mxu0 %v69
  %106 = vmatprep.subr.mxu0 0.0
  %107 = vmatpush1.msra.mxu0 %v68
  %108 = vmatprep.subr.mxu0 0.0
  %109 = vmatpush1.msra.mxu0 %v67
  %110 = vmatprep.subr.mxu0 0.0
  %111 = vmatpush1.msra.mxu0 %v66
  %112 = vmatprep.subr.mxu0 0.0
  %113 = vmatpush1.msra.mxu0 %v65
  %114 = vmatprep.subr.mxu0 0.0
  %115 = vmatpush1.msra.mxu0 %v64
  %116 = vmatprep.subr.mxu0 0.0
  %117 = vmatpush1.msra.mxu0 %v63
  %118 = vmatprep.subr.mxu0 0.0
  %119 = vmatpush1.msra.mxu0 %v62
  %120 = vmatprep.subr.mxu0 0.0
  %121 = vmatpush1.msra.mxu0 %v61
  %122 = vmatprep.subr.mxu0 0.0
  %123 = vmatpush1.msra.mxu0 %v60
  %124 = vmatprep.subr.mxu0 0.0
  %125 = vmatpush1.msra.mxu0 %v59
  %126 = vmatprep.subr.mxu0 0.0
  %127 = vmatpush1.msra.mxu0 %v58
  %128 = vmatprep.subr.mxu0 0.0
  %129 = vmatpush1.msra.mxu0 %v57
  %130 = vmatprep.subr.mxu0 0.0
  %131 = vmatpush1.msra.mxu0 %v56
  %132 = vmatprep.subr.mxu0 0.0
  %133 = vmatpush2.msra.mxu0 0.0
  %134 = vmatprep.subr.mxu0 0.0
  %135 = vmatpush2.msra.mxu0 0.0
  %136 = vmatprep.subr.mxu0 0.0
  %137 = vmatpush2.msra.mxu0 0.0
  %138 = vmatprep.subr.mxu0 0.0
  %139 = vmatpush2.msra.mxu0 0.0
  %140 = vmatprep.subr.mxu0 0.0
  %141 = vmatpush2.msra.mxu0 0.0
  %142 = vmatprep.subr.mxu0 0.0
  %143 = vmatpush2.msra.mxu0 0.0
  %144 = vmatprep.subr.mxu0 0.0
  %145 = vmatpush2.msra.mxu0 0.0
  %146 = vmatprep.subr.mxu0 0.0
  %147 = vmatpush2.msra.mxu0 0.0
  %148 = vmatprep.subr.mxu0 0.0
  %149 = vmatpush2.msra.mxu0 0.0
  %150 = vmatprep.subr.mxu0 0.0
  %151 = vmatpush2.msra.mxu0 0.0
  %152 = vmatprep.subr.mxu0 0.0
  %153 = vmatpush2.msra.mxu0 0.0
  %154 = vmatprep.subr.mxu0 0.0
  %155 = vmatpush2.msra.mxu0 0.0
  %156 = vmatprep.subr.mxu0 0.0
  %157 = vmatpush2.msra.mxu0 0.0
  %158 = vmatprep.subr.mxu0 0.0
  %159 = vmatpush2.msra.mxu0 0.0
  %160 = vmatprep.subr.mxu0 0.0
  %161 = vmatpush2.msra.mxu0 0.0
  %162 = vmatprep.subr.mxu0 0.0
  %163 = vmatpush2.msra.mxu0 0.0
  %164 = vmatprep.mubr.f32.mxu0 0.0
  %165 = vmatmul.mubr.f32.gmra.mxu0 %v72
  %v166 = vpop.f32.mrf.mxu0
  %v167 = vadd.f32 %v83, %v166
  %v168 = vpop.f32.mrf.mxu0
  %169 = vmatprep.mubr.f32.mxu0 0.0
  %170 = vmatmul.mubr.f32.gmra.mxu0 %v73
  %v171 = vpop.f32.mrf.mxu0
  %v172 = vadd.f32 %v88, %v171
  %v173 = vpop.f32.mrf.mxu0
  %174 = vmatprep.mubr.f32.mxu0 0.0
  %175 = vmatmul.mubr.f32.gmra.mxu0 %v74
  %v176 = vpop.f32.mrf.mxu0
  %v177 = vadd.f32 %v93, %v176
  %v178 = vpop.f32.mrf.mxu0
  %179 = vmatprep.mubr.f32.mxu0 0.0
  %180 = vmatmul.mubr.f32.gmra.mxu0 %v75
  %v181 = vpop.f32.mrf.mxu0
  %v182 = vadd.f32 %v98, %v181
  %v183 = vpop.f32.mrf.mxu0
  %184 = vdwg.mxu0
  %v185 = vmax.f32 %v167, 0.0
  %v186 = vmax.f32 %v172, 0.0
  %v187 = vmax.f32 %v177, 0.0
  %v188 = vmax.f32 %v182, 0.0
  %v189 = vld [vmem:[%s3] sm:$0xff]
  %v190 = vld [vmem:[%s3 + $0x8] sm:$0xff]
  %v191 = vld [vmem:[%s3 + $0x10] sm:$0xff]
  %v192 = vld [vmem:[%s3 + $0x18] sm:$0xff]
  %v193 = vld [vmem:[%s3 + $0x20] sm:$0xff]
  %v194 = vld [vmem:[%s3 + $0x28] sm:$0xff]
  %v195 = vld [vmem:[%s3 + $0x30] sm:$0xff]
  %v196 = vld [vmem:[%s3 + $0x38] sm:$0xff]
  %v197 = vld [vmem:[%s3 + $0x40] sm:$0xff]
  %v198 = vld [vmem:[%s3 + $0x48] sm:$0xff]
  %v199 = vld [vmem:[%s3 + $0x50] sm:$0xff]
  %v200 = vld [vmem:[%s3 + $0x58] sm:$0xff]
  %v201 = vld [vmem:[%s3 + $0x60] sm:$0xff]
  %v202 = vld [vmem:[%s3 + $0x68] sm:$0xff]
  %v203 = vld [vmem:[%s3 + $0x70] sm:$0xff]
  %v204 = vld [vmem:[%s3 + $0x78] sm:$0xff]
  %vm205 = vcmask 261120
  %v207 = vsel %vm205, %v189, 0
  %v210 = vsel %vm205, %v190, 0
  %v213 = vsel %vm205, %v191, 0
  %v216 = vsel %vm205, %v192, 0
  %v219 = vsel %vm205, %v193, 0
  %v222 = vsel %vm205, %v194, 0
  %v225 = vsel %vm205, %v195, 0
  %v228 = vsel %vm205, %v196, 0
  %v231 = vsel %vm205, %v197, 0
  %v234 = vsel %vm205, %v198, 0
  %v237 = vsel %vm205, %v199, 0
  %v240 = vsel %vm205, %v200, 0
  %v243 = vsel %vm205, %v201, 0
  %v246 = vsel %vm205, %v202, 0
  %v249 = vsel %vm205, %v203, 0
  %v252 = vsel %vm205, %v204, 0
  %254 = vmatprep.subr.mxu0 0.0
  %255 = vmatpush1.msra.mxu0 0.0
  %256 = vmatprep.subr.mxu0 0.0
  %257 = vmatpush1.msra.mxu0 0.0
  %258 = vmatprep.subr.mxu0 0.0
  %259 = vmatpush1.msra.mxu0 0.0
  %260 = vmatprep.subr.mxu0 0.0
  %261 = vmatpush1.msra.mxu0 0.0
  %262 = vmatprep.subr.mxu0 0.0
  %263 = vmatpush1.msra.mxu0 0.0
  %264 = vmatprep.subr.mxu0 0.0
  %265 = vmatpush1.msra.mxu0 0.0
  %266 = vmatprep.subr.mxu0 0.0
  %267 = vmatpush1.msra.mxu0 0.0
  %268 = vmatprep.subr.mxu0 0.0
  %269 = vmatpush1.msra.mxu0 0.0
  %270 = vmatprep.subr.mxu0 0.0
  %271 = vmatpush1.msra.mxu0 0.0
  %272 = vmatprep.subr.mxu0 0.0
  %273 = vmatpush1.msra.mxu0 0.0
  %274 = vmatprep.subr.mxu0 0.0
  %275 = vmatpush1.msra.mxu0 0.0
  %276 = vmatprep.subr.mxu0 0.0
  %277 = vmatpush1.msra.mxu0 0.0
  %278 = vmatprep.subr.mxu0 0.0
  %279 = vmatpush1.msra.mxu0 %v188
  %280 = vmatprep.subr.mxu0 0.0
  %281 = vmatpush1.msra.mxu0 %v187
  %282 = vmatprep.subr.mxu0 0.0
  %283 = vmatpush1.msra.mxu0 %v186
  %284 = vmatprep.subr.mxu0 0.0
  %285 = vmatpush1.msra.mxu0 %v185
  %286 = vmatprep.subr.mxu0 0.0
  %287 = vmatpush2.msra.mxu0 0.0
  %288 = vmatprep.subr.mxu0 0.0
  %289 = vmatpush2.msra.mxu0 0.0
  %290 = vmatprep.subr.mxu0 0.0
  %291 = vmatpush2.msra.mxu0 0.0
  %292 = vmatprep.subr.mxu0 0.0
  %293 = vmatpush2.msra.mxu0 0.0
  %294 = vmatprep.subr.mxu0 0.0
  %295 = vmatpush2.msra.mxu0 0.0
  %296 = vmatprep.subr.mxu0 0.0
  %297 = vmatpush2.msra.mxu0 0.0
  %298 = vmatprep.subr.mxu0 0.0
  %299 = vmatpush2.msra.mxu0 0.0
  %300 = vmatprep.subr.mxu0 0.0
  %301 = vmatpush2.msra.mxu0 0.0
  %302 = vmatprep.subr.mxu0 0.0
  %303 = vmatpush2.msra.mxu0 0.0
  %304 = vmatprep.subr.mxu0 0.0
  %305 = vmatpush2.msra.mxu0 0.0
  %306 = vmatprep.subr.mxu0 0.0
  %307 = vmatpush2.msra.mxu0 0.0
  %308 = vmatprep.subr.mxu0 0.0
  %309 = vmatpush2.msra.mxu0 0.0
  %310 = vmatprep.subr.mxu0 0.0
  %311 = vmatpush2.msra.mxu0 0.0
  %312 = vmatprep.subr.mxu0 0.0
  %313 = vmatpush2.msra.mxu0 0.0
  %314 = vmatprep.subr.mxu0 0.0
  %315 = vmatpush2.msra.mxu0 0.0
  %316 = vmatprep.subr.mxu0 0.0
  %317 = vmatpush2.msra.mxu0 0.0
  %318 = vmatprep.mubr.f32.mxu0 0.0
  %319 = vmatmul.mubr.f32.gmra.mxu0 %v207
  %v320 = vpop.f32.mrf.mxu0
  %v321 = vadd.f32 0.0, %v320
  %v322 = vpop.f32.mrf.mxu0
  %323 = vmatprep.mubr.f32.mxu0 0.0
  %324 = vmatmul.mubr.f32.gmra.mxu0 %v210
  %v325 = vpop.f32.mrf.mxu0
  %v326 = vadd.f32 0.0, %v325
  %v327 = vpop.f32.mrf.mxu0
  %328 = vmatprep.mubr.f32.mxu0 0.0
  %329 = vmatmul.mubr.f32.gmra.mxu0 %v213
  %v330 = vpop.f32.mrf.mxu0
  %v331 = vadd.f32 0.0, %v330
  %v332 = vpop.f32.mrf.mxu0
  %333 = vmatprep.mubr.f32.mxu0 0.0
  %334 = vmatmul.mubr.f32.gmra.mxu0 %v216
  %v335 = vpop.f32.mrf.mxu0
  %v336 = vadd.f32 0.0, %v335
  %v337 = vpop.f32.mrf.mxu0
  %338 = vmatprep.mubr.f32.mxu0 0.0
  %339 = vmatmul.mubr.f32.gmra.mxu0 %v219
  %v340 = vpop.f32.mrf.mxu0
  %v341 = vadd.f32 0.0, %v340
  %v342 = vpop.f32.mrf.mxu0
  %343 = vmatprep.mubr.f32.mxu0 0.0
  %344 = vmatmul.mubr.f32.gmra.mxu0 %v222
  %v345 = vpop.f32.mrf.mxu0
  %v346 = vadd.f32 0.0, %v345
  %v347 = vpop.f32.mrf.mxu0
  %348 = vmatprep.mubr.f32.mxu0 0.0
  %349 = vmatmul.mubr.f32.gmra.mxu0 %v225
  %v350 = vpop.f32.mrf.mxu0
  %v351 = vadd.f32 0.0, %v350
  %v352 = vpop.f32.mrf.mxu0
  %353 = vmatprep.mubr.f32.mxu0 0.0
  %354 = vmatmul.mubr.f32.gmra.mxu0 %v228
  %v355 = vpop.f32.mrf.mxu0
  %v356 = vadd.f32 0.0, %v355
  %v357 = vpop.f32.mrf.mxu0
  %358 = vmatprep.mubr.f32.mxu0 0.0
  %359 = vmatmul.mubr.f32.gmra.mxu0 %v231
  %v360 = vpop.f32.mrf.mxu0
  %v361 = vadd.f32 0.0, %v360
  %v362 = vpop.f32.mrf.mxu0
  %363 = vmatprep.mubr.f32.mxu0 0.0
  %364 = vmatmul.mubr.f32.gmra.mxu0 %v234
  %v365 = vpop.f32.mrf.mxu0
  %v366 = vadd.f32 0.0, %v365
  %v367 = vpop.f32.mrf.mxu0
  %368 = vmatprep.mubr.f32.mxu0 0.0
  %369 = vmatmul.mubr.f32.gmra.mxu0 %v237
  %v370 = vpop.f32.mrf.mxu0
  %v371 = vadd.f32 0.0, %v370
  %v372 = vpop.f32.mrf.mxu0
  %373 = vmatprep.mubr.f32.mxu0 0.0
  %374 = vmatmul.mubr.f32.gmra.mxu0 %v240
  %v375 = vpop.f32.mrf.mxu0
  %v376 = vadd.f32 0.0, %v375
  %v377 = vpop.f32.mrf.mxu0
  %378 = vmatprep.mubr.f32.mxu0 0.0
  %379 = vmatmul.mubr.f32.gmra.mxu0 %v243
  %v380 = vpop.f32.mrf.mxu0
  %v381 = vadd.f32 0.0, %v380
  %v382 = vpop.f32.mrf.mxu0
  %383 = vmatprep.mubr.f32.mxu0 0.0
  %384 = vmatmul.mubr.f32.gmra.mxu0 %v246
  %v385 = vpop.f32.mrf.mxu0
  %v386 = vadd.f32 0.0, %v385
  %v387 = vpop.f32.mrf.mxu0
  %388 = vmatprep.mubr.f32.mxu0 0.0
  %389 = vmatmul.mubr.f32.gmra.mxu0 %v249
  %v390 = vpop.f32.mrf.mxu0
  %v391 = vadd.f32 0.0, %v390
  %v392 = vpop.f32.mrf.mxu0
  %393 = vmatprep.mubr.f32.mxu0 0.0
  %394 = vmatmul.mubr.f32.gmra.mxu0 %v252
  %v395 = vpop.f32.mrf.mxu0
  %v396 = vadd.f32 0.0, %v395
  %v397 = vpop.f32.mrf.mxu0
  %398 = vdwg.mxu0
  %vm399 = vcmask 523264
  %v400 = vsel %vm399, %v321, 0.0
  %401 = vadd.xlane.f32.xlu0 %v400
  %v402 = vpop.xlane.xlu0 %401
  %v403 = vsel %vm399, %v326, 0.0
  %404 = vadd.xlane.f32.xlu0 %v403
  %v405 = vpop.xlane.xlu0 %404
  %v406 = vsel %vm399, %v331, 0.0
  %407 = vadd.xlane.f32.xlu0 %v406
  %v408 = vpop.xlane.xlu0 %407
  %v409 = vsel %vm399, %v336, 0.0
  %410 = vadd.xlane.f32.xlu0 %v409
  %v411 = vpop.xlane.xlu0 %410
  %v412 = vsel %vm399, %v341, 0.0
  %413 = vadd.xlane.f32.xlu0 %v412
  %v414 = vpop.xlane.xlu0 %413
  %v415 = vsel %vm399, %v346, 0.0
  %416 = vadd.xlane.f32.xlu0 %v415
  %v417 = vpop.xlane.xlu0 %416
  %v418 = vsel %vm399, %v351, 0.0
  %419 = vadd.xlane.f32.xlu0 %v418
  %v420 = vpop.xlane.xlu0 %419
  %v421 = vsel %vm399, %v356, 0.0
  %422 = vadd.xlane.f32.xlu0 %v421
  %v423 = vpop.xlane.xlu0 %422
  %v424 = vsel %vm399, %v361, 0.0
  %425 = vadd.xlane.f32.xlu0 %v424
  %v426 = vpop.xlane.xlu0 %425
  %v427 = vsel %vm399, %v366, 0.0
  %428 = vadd.xlane.f32.xlu0 %v427
  %v429 = vpop.xlane.xlu0 %428
  %v430 = vsel %vm399, %v371, 0.0
  %431 = vadd.xlane.f32.xlu0 %v430
  %v432 = vpop.xlane.xlu0 %431
  %v433 = vsel %vm399, %v376, 0.0
  %434 = vadd.xlane.f32.xlu0 %v433
  %v435 = vpop.xlane.xlu0 %434
  %v436 = vsel %vm399, %v381, 0.0
  %437 = vadd.xlane.f32.xlu0 %v436
  %v438 = vpop.xlane.xlu0 %437
  %v439 = vsel %vm399, %v386, 0.0
  %440 = vadd.xlane.f32.xlu0 %v439
  %v441 = vpop.xlane.xlu0 %440
  %v442 = vsel %vm399, %v391, 0.0
  %443 = vadd.xlane.f32.xlu0 %v442
  %v444 = vpop.xlane.xlu0 %443
  %v445 = vsel %vm399, %v396, 0.0
  %446 = vadd.xlane.f32.xlu0 %v445
  %v447 = vpop.xlane.xlu0 %446
  %v448 = vadd.f32 %v402, 0.0
  %v449 = vadd.f32 %v405, 0.0
  %v450 = vadd.f32 %v408, 0.0
  %v451 = vadd.f32 %v411, 0.0
  %v452 = vadd.f32 %v414, 0.0
  %v453 = vadd.f32 %v417, 0.0
  %v454 = vadd.f32 %v420, 0.0
  %v455 = vadd.f32 %v423, 0.0
  %v456 = vadd.f32 %v426, 0.0
  %v457 = vadd.f32 %v429, 0.0
  %v458 = vadd.f32 %v432, 0.0
  %v459 = vadd.f32 %v435, 0.0
  %v460 = vadd.f32 %v438, 0.0
  %v461 = vadd.f32 %v441, 0.0
  %v462 = vadd.f32 %v444, 0.0
  %v463 = vadd.f32 %v447, 0.0
  %v464 = vmul.f32 %v321, %v321
  %v465 = vmul.f32 %v326, %v326
  %v466 = vmul.f32 %v331, %v331
  %v467 = vmul.f32 %v336, %v336
  %v468 = vmul.f32 %v341, %v341
  %v469 = vmul.f32 %v346, %v346
  %v470 = vmul.f32 %v351, %v351
  %v471 = vmul.f32 %v356, %v356
  %v472 = vmul.f32 %v361, %v361
  %v473 = vmul.f32 %v366, %v366
  %v474 = vmul.f32 %v371, %v371
  %v475 = vmul.f32 %v376, %v376
  %v476 = vmul.f32 %v381, %v381
  %v477 = vmul.f32 %v386, %v386
  %v478 = vmul.f32 %v391, %v391
  %v479 = vmul.f32 %v396, %v396
  %v480 = vsel %vm399, %v464, 0.0
  %481 = vadd.xlane.f32.xlu0 %v480
  %v482 = vpop.xlane.xlu0 %481
  %v483 = vsel %vm399, %v465, 0.0
  %484 = vadd.xlane.f32.xlu0 %v483
  %v485 = vpop.xlane.xlu0 %484
  %v486 = vsel %vm399, %v466, 0.0
  %487 = vadd.xlane.f32.xlu0 %v486
  %v488 = vpop.xlane.xlu0 %487
  %v489 = vsel %vm399, %v467, 0.0
  %490 = vadd.xlane.f32.xlu0 %v489
  %v491 = vpop.xlane.xlu0 %490
  %v492 = vsel %vm399, %v468, 0.0
  %493 = vadd.xlane.f32.xlu0 %v492
  %v494 = vpop.xlane.xlu0 %493
  %v495 = vsel %vm399, %v469, 0.0
  %496 = vadd.xlane.f32.xlu0 %v495
  %v497 = vpop.xlane.xlu0 %496
  %v498 = vsel %vm399, %v470, 0.0
  %499 = vadd.xlane.f32.xlu0 %v498
  %v500 = vpop.xlane.xlu0 %499
  %v501 = vsel %vm399, %v471, 0.0
  %502 = vadd.xlane.f32.xlu0 %v501
  %v503 = vpop.xlane.xlu0 %502
  %v504 = vsel %vm399, %v472, 0.0
  %505 = vadd.xlane.f32.xlu0 %v504
  %v506 = vpop.xlane.xlu0 %505
  %v507 = vsel %vm399, %v473, 0.0
  %508 = vadd.xlane.f32.xlu0 %v507
  %v509 = vpop.xlane.xlu0 %508
  %v510 = vsel %vm399, %v474, 0.0
  %511 = vadd.xlane.f32.xlu0 %v510
  %v512 = vpop.xlane.xlu0 %511
  %v513 = vsel %vm399, %v475, 0.0
  %514 = vadd.xlane.f32.xlu0 %v513
  %v515 = vpop.xlane.xlu0 %514
  %v516 = vsel %vm399, %v476, 0.0
  %517 = vadd.xlane.f32.xlu0 %v516
  %v518 = vpop.xlane.xlu0 %517
  %v519 = vsel %vm399, %v477, 0.0
  %520 = vadd.xlane.f32.xlu0 %v519
  %v521 = vpop.xlane.xlu0 %520
  %v522 = vsel %vm399, %v478, 0.0
  %523 = vadd.xlane.f32.xlu0 %v522
  %v524 = vpop.xlane.xlu0 %523
  %v525 = vsel %vm399, %v479, 0.0
  %526 = vadd.xlane.f32.xlu0 %v525
  %v527 = vpop.xlane.xlu0 %526
  %v528 = vadd.f32 %v482, 0.0
  %v529 = vadd.f32 %v485, 0.0
  %v530 = vadd.f32 %v488, 0.0
  %v531 = vadd.f32 %v491, 0.0
  %v532 = vadd.f32 %v494, 0.0
  %v533 = vadd.f32 %v497, 0.0
  %v534 = vadd.f32 %v500, 0.0
  %v535 = vadd.f32 %v503, 0.0
  %v536 = vadd.f32 %v506, 0.0
  %v537 = vadd.f32 %v509, 0.0
  %v538 = vadd.f32 %v512, 0.0
  %v539 = vadd.f32 %v515, 0.0
  %v540 = vadd.f32 %v518, 0.0
  %v541 = vadd.f32 %v521, 0.0
  %v542 = vadd.f32 %v524, 0.0
  %v543 = vadd.f32 %v527, 0.0
  %s544 = scalar_lea.vmem %s0, 128
  %v545 = vld [vmem:[%s544] sm:$0xff]
  %v546 = vld [vmem:[%s544 + $0x8] sm:$0xff]
  %v547 = vld [vmem:[%s544 + $0x10] sm:$0xff]
  %v548 = vld [vmem:[%s544 + $0x18] sm:$0xff]
  %v549 = vld [vmem:[%s544 + $0x20] sm:$0xff]
  %v550 = vld [vmem:[%s544 + $0x28] sm:$0xff]
  %v551 = vld [vmem:[%s544 + $0x30] sm:$0xff]
  %v552 = vld [vmem:[%s544 + $0x38] sm:$0xff]
  %v553 = vld [vmem:[%s544 + $0x40] sm:$0xff]
  %v554 = vld [vmem:[%s544 + $0x48] sm:$0xff]
  %v555 = vld [vmem:[%s544 + $0x50] sm:$0xff]
  %v556 = vld [vmem:[%s544 + $0x58] sm:$0xff]
  %v557 = vld [vmem:[%s544 + $0x60] sm:$0xff]
  %v558 = vld [vmem:[%s544 + $0x68] sm:$0xff]
  %v559 = vld [vmem:[%s544 + $0x70] sm:$0xff]
  %v560 = vld [vmem:[%s544 + $0x78] sm:$0xff]
  %561 = vmatprep.subr.mxu0 0.0
  %562 = vmatpush1.msra.mxu0 %v560
  %563 = vmatprep.subr.mxu0 0.0
  %564 = vmatpush1.msra.mxu0 %v559
  %565 = vmatprep.subr.mxu0 0.0
  %566 = vmatpush1.msra.mxu0 %v558
  %567 = vmatprep.subr.mxu0 0.0
  %568 = vmatpush1.msra.mxu0 %v557
  %569 = vmatprep.subr.mxu0 0.0
  %570 = vmatpush1.msra.mxu0 %v556
  %571 = vmatprep.subr.mxu0 0.0
  %572 = vmatpush1.msra.mxu0 %v555
  %573 = vmatprep.subr.mxu0 0.0
  %574 = vmatpush1.msra.mxu0 %v554
  %575 = vmatprep.subr.mxu0 0.0
  %576 = vmatpush1.msra.mxu0 %v553
  %577 = vmatprep.subr.mxu0 0.0
  %578 = vmatpush1.msra.mxu0 %v552
  %579 = vmatprep.subr.mxu0 0.0
  %580 = vmatpush1.msra.mxu0 %v551
  %581 = vmatprep.subr.mxu0 0.0
  %582 = vmatpush1.msra.mxu0 %v550
  %583 = vmatprep.subr.mxu0 0.0
  %584 = vmatpush1.msra.mxu0 %v549
  %585 = vmatprep.subr.mxu0 0.0
  %586 = vmatpush1.msra.mxu0 %v548
  %587 = vmatprep.subr.mxu0 0.0
  %588 = vmatpush1.msra.mxu0 %v547
  %589 = vmatprep.subr.mxu0 0.0
  %590 = vmatpush1.msra.mxu0 %v546
  %591 = vmatprep.subr.mxu0 0.0
  %592 = vmatpush1.msra.mxu0 %v545
  %593 = vmatprep.subr.mxu0 0.0
  %594 = vmatpush2.msra.mxu0 0.0
  %595 = vmatprep.subr.mxu0 0.0
  %596 = vmatpush2.msra.mxu0 0.0
  %597 = vmatprep.subr.mxu0 0.0
  %598 = vmatpush2.msra.mxu0 0.0
  %599 = vmatprep.subr.mxu0 0.0
  %600 = vmatpush2.msra.mxu0 0.0
  %601 = vmatprep.subr.mxu0 0.0
  %602 = vmatpush2.msra.mxu0 0.0
  %603 = vmatprep.subr.mxu0 0.0
  %604 = vmatpush2.msra.mxu0 0.0
  %605 = vmatprep.subr.mxu0 0.0
  %606 = vmatpush2.msra.mxu0 0.0
  %607 = vmatprep.subr.mxu0 0.0
  %608 = vmatpush2.msra.mxu0 0.0
  %609 = vmatprep.subr.mxu0 0.0
  %610 = vmatpush2.msra.mxu0 0.0
  %611 = vmatprep.subr.mxu0 0.0
  %612 = vmatpush2.msra.mxu0 0.0
  %613 = vmatprep.subr.mxu0 0.0
  %614 = vmatpush2.msra.mxu0 0.0
  %615 = vmatprep.subr.mxu0 0.0
  %616 = vmatpush2.msra.mxu0 0.0
  %617 = vmatprep.subr.mxu0 0.0
  %618 = vmatpush2.msra.mxu0 0.0
  %619 = vmatprep.subr.mxu0 0.0
  %620 = vmatpush2.msra.mxu0 0.0
  %621 = vmatprep.subr.mxu0 0.0
  %622 = vmatpush2.msra.mxu0 0.0
  %623 = vmatprep.subr.mxu0 0.0
  %624 = vmatpush2.msra.mxu0 0.0
  %625 = vmatprep.mubr.f32.mxu0 0.0
  %626 = vmatmul.mubr.f32.gmra.mxu0 %v72
  %v627 = vpop.f32.mrf.mxu0
  %v628 = vadd.f32 %v83, %v627
  %v629 = vpop.f32.mrf.mxu0
  %630 = vmatprep.mubr.f32.mxu0 0.0
  %631 = vmatmul.mubr.f32.gmra.mxu0 %v73
  %v632 = vpop.f32.mrf.mxu0
  %v633 = vadd.f32 %v88, %v632
  %v634 = vpop.f32.mrf.mxu0
  %635 = vmatprep.mubr.f32.mxu0 0.0
  %636 = vmatmul.mubr.f32.gmra.mxu0 %v74
  %v637 = vpop.f32.mrf.mxu0
  %v638 = vadd.f32 %v93, %v637
  %v639 = vpop.f32.mrf.mxu0
  %640 = vmatprep.mubr.f32.mxu0 0.0
  %641 = vmatmul.mubr.f32.gmra.mxu0 %v75
  %v642 = vpop.f32.mrf.mxu0
  %v643 = vadd.f32 %v98, %v642
  %v644 = vpop.f32.mrf.mxu0
  %645 = vdwg.mxu0
  %v646 = vmax.f32 %v628, 0.0
  %v647 = vmax.f32 %v633, 0.0
  %v648 = vmax.f32 %v638, 0.0
  %v649 = vmax.f32 %v643, 0.0
  %650 = vmatprep.subr.mxu0 0.0
  %651 = vmatpush1.msra.mxu0 0.0
  %652 = vmatprep.subr.mxu0 0.0
  %653 = vmatpush1.msra.mxu0 0.0
  %654 = vmatprep.subr.mxu0 0.0
  %655 = vmatpush1.msra.mxu0 0.0
  %656 = vmatprep.subr.mxu0 0.0
  %657 = vmatpush1.msra.mxu0 0.0
  %658 = vmatprep.subr.mxu0 0.0
  %659 = vmatpush1.msra.mxu0 0.0
  %660 = vmatprep.subr.mxu0 0.0
  %661 = vmatpush1.msra.mxu0 0.0
  %662 = vmatprep.subr.mxu0 0.0
  %663 = vmatpush1.msra.mxu0 0.0
  %664 = vmatprep.subr.mxu0 0.0
  %665 = vmatpush1.msra.mxu0 0.0
  %666 = vmatprep.subr.mxu0 0.0
  %667 = vmatpush1.msra.mxu0 0.0
  %668 = vmatprep.subr.mxu0 0.0
  %669 = vmatpush1.msra.mxu0 0.0
  %670 = vmatprep.subr.mxu0 0.0
  %671 = vmatpush1.msra.mxu0 0.0
  %672 = vmatprep.subr.mxu0 0.0
  %673 = vmatpush1.msra.mxu0 0.0
  %674 = vmatprep.subr.mxu0 0.0
  %675 = vmatpush1.msra.mxu0 %v649
  %676 = vmatprep.subr.mxu0 0.0
  %677 = vmatpush1.msra.mxu0 %v648
  %678 = vmatprep.subr.mxu0 0.0
  %679 = vmatpush1.msra.mxu0 %v647
  %680 = vmatprep.subr.mxu0 0.0
  %681 = vmatpush1.msra.mxu0 %v646
  %682 = vmatprep.subr.mxu0 0.0
  %683 = vmatpush2.msra.mxu0 0.0
  %684 = vmatprep.subr.mxu0 0.0
  %685 = vmatpush2.msra.mxu0 0.0
  %686 = vmatprep.subr.mxu0 0.0
  %687 = vmatpush2.msra.mxu0 0.0
  %688 = vmatprep.subr.mxu0 0.0
  %689 = vmatpush2.msra.mxu0 0.0
  %690 = vmatprep.subr.mxu0 0.0
  %691 = vmatpush2.msra.mxu0 0.0
  %692 = vmatprep.subr.mxu0 0.0
  %693 = vmatpush2.msra.mxu0 0.0
  %694 = vmatprep.subr.mxu0 0.0
  %695 = vmatpush2.msra.mxu0 0.0
  %696 = vmatprep.subr.mxu0 0.0
  %697 = vmatpush2.msra.mxu0 0.0
  %698 = vmatprep.subr.mxu0 0.0
  %699 = vmatpush2.msra.mxu0 0.0
  %700 = vmatprep.subr.mxu0 0.0
  %701 = vmatpush2.msra.mxu0 0.0
  %702 = vmatprep.subr.mxu0 0.0
  %703 = vmatpush2.msra.mxu0 0.0
  %704 = vmatprep.subr.mxu0 0.0
  %705 = vmatpush2.msra.mxu0 0.0
  %706 = vmatprep.subr.mxu0 0.0
  %707 = vmatpush2.msra.mxu0 0.0
  %708 = vmatprep.subr.mxu0 0.0
  %709 = vmatpush2.msra.mxu0 0.0
  %710 = vmatprep.subr.mxu0 0.0
  %711 = vmatpush2.msra.mxu0 0.0
  %712 = vmatprep.subr.mxu0 0.0
  %713 = vmatpush2.msra.mxu0 0.0
  %714 = vmatprep.mubr.f32.mxu0 0.0
  %715 = vmatmul.mubr.f32.gmra.mxu0 %v207
  %v716 = vpop.f32.mrf.mxu0
  %v717 = vadd.f32 0.0, %v716
  %v718 = vpop.f32.mrf.mxu0
  %719 = vmatprep.mubr.f32.mxu0 0.0
  %720 = vmatmul.mubr.f32.gmra.mxu0 %v210
  %v721 = vpop.f32.mrf.mxu0
  %v722 = vadd.f32 0.0, %v721
  %v723 = vpop.f32.mrf.mxu0
  %724 = vmatprep.mubr.f32.mxu0 0.0
  %725 = vmatmul.mubr.f32.gmra.mxu0 %v213
  %v726 = vpop.f32.mrf.mxu0
  %v727 = vadd.f32 0.0, %v726
  %v728 = vpop.f32.mrf.mxu0
  %729 = vmatprep.mubr.f32.mxu0 0.0
  %730 = vmatmul.mubr.f32.gmra.mxu0 %v216
  %v731 = vpop.f32.mrf.mxu0
  %v732 = vadd.f32 0.0, %v731
  %v733 = vpop.f32.mrf.mxu0
  %734 = vmatprep.mubr.f32.mxu0 0.0
  %735 = vmatmul.mubr.f32.gmra.mxu0 %v219
  %v736 = vpop.f32.mrf.mxu0
  %v737 = vadd.f32 0.0, %v736
  %v738 = vpop.f32.mrf.mxu0
  %739 = vmatprep.mubr.f32.mxu0 0.0
  %740 = vmatmul.mubr.f32.gmra.mxu0 %v222
  %v741 = vpop.f32.mrf.mxu0
  %v742 = vadd.f32 0.0, %v741
  %v743 = vpop.f32.mrf.mxu0
  %744 = vmatprep.mubr.f32.mxu0 0.0
  %745 = vmatmul.mubr.f32.gmra.mxu0 %v225
  %v746 = vpop.f32.mrf.mxu0
  %v747 = vadd.f32 0.0, %v746
  %v748 = vpop.f32.mrf.mxu0
  %749 = vmatprep.mubr.f32.mxu0 0.0
  %750 = vmatmul.mubr.f32.gmra.mxu0 %v228
  %v751 = vpop.f32.mrf.mxu0
  %v752 = vadd.f32 0.0, %v751
  %v753 = vpop.f32.mrf.mxu0
  %754 = vmatprep.mubr.f32.mxu0 0.0
  %755 = vmatmul.mubr.f32.gmra.mxu0 %v231
  %v756 = vpop.f32.mrf.mxu0
  %v757 = vadd.f32 0.0, %v756
  %v758 = vpop.f32.mrf.mxu0
  %759 = vmatprep.mubr.f32.mxu0 0.0
  %760 = vmatmul.mubr.f32.gmra.mxu0 %v234
  %v761 = vpop.f32.mrf.mxu0
  %v762 = vadd.f32 0.0, %v761
  %v763 = vpop.f32.mrf.mxu0
  %764 = vmatprep.mubr.f32.mxu0 0.0
  %765 = vmatmul.mubr.f32.gmra.mxu0 %v237
  %v766 = vpop.f32.mrf.mxu0
  %v767 = vadd.f32 0.0, %v766
  %v768 = vpop.f32.mrf.mxu0
  %769 = vmatprep.mubr.f32.mxu0 0.0
  %770 = vmatmul.mubr.f32.gmra.mxu0 %v240
  %v771 = vpop.f32.mrf.mxu0
  %v772 = vadd.f32 0.0, %v771
  %v773 = vpop.f32.mrf.mxu0
  %774 = vmatprep.mubr.f32.mxu0 0.0
  %775 = vmatmul.mubr.f32.gmra.mxu0 %v243
  %v776 = vpop.f32.mrf.mxu0
  %v777 = vadd.f32 0.0, %v776
  %v778 = vpop.f32.mrf.mxu0
  %779 = vmatprep.mubr.f32.mxu0 0.0
  %780 = vmatmul.mubr.f32.gmra.mxu0 %v246
  %v781 = vpop.f32.mrf.mxu0
  %v782 = vadd.f32 0.0, %v781
  %v783 = vpop.f32.mrf.mxu0
  %784 = vmatprep.mubr.f32.mxu0 0.0
  %785 = vmatmul.mubr.f32.gmra.mxu0 %v249
  %v786 = vpop.f32.mrf.mxu0
  %v787 = vadd.f32 0.0, %v786
  %v788 = vpop.f32.mrf.mxu0
  %789 = vmatprep.mubr.f32.mxu0 0.0
  %790 = vmatmul.mubr.f32.gmra.mxu0 %v252
  %v791 = vpop.f32.mrf.mxu0
  %v792 = vadd.f32 0.0, %v791
  %v793 = vpop.f32.mrf.mxu0
  %794 = vdwg.mxu0
  %v795 = vsel %vm399, %v717, 0.0
  %796 = vadd.xlane.f32.xlu0 %v795
  %v797 = vpop.xlane.xlu0 %796
  %v798 = vsel %vm399, %v722, 0.0
  %799 = vadd.xlane.f32.xlu0 %v798
  %v800 = vpop.xlane.xlu0 %799
  %v801 = vsel %vm399, %v727, 0.0
  %802 = vadd.xlane.f32.xlu0 %v801
  %v803 = vpop.xlane.xlu0 %802
  %v804 = vsel %vm399, %v732, 0.0
  %805 = vadd.xlane.f32.xlu0 %v804
  %v806 = vpop.xlane.xlu0 %805
  %v807 = vsel %vm399, %v737, 0.0
  %808 = vadd.xlane.f32.xlu0 %v807
  %v809 = vpop.xlane.xlu0 %808
  %v810 = vsel %vm399, %v742, 0.0
  %811 = vadd.xlane.f32.xlu0 %v810
  %v812 = vpop.xlane.xlu0 %811
  %v813 = vsel %vm399, %v747, 0.0
  %814 = vadd.xlane.f32.xlu0 %v813
  %v815 = vpop.xlane.xlu0 %814
  %v816 = vsel %vm399, %v752, 0.0
  %817 = vadd.xlane.f32.xlu0 %v816
  %v818 = vpop.xlane.xlu0 %817
  %v819 = vsel %vm399, %v757, 0.0
  %820 = vadd.xlane.f32.xlu0 %v819
  %v821 = vpop.xlane.xlu0 %820
  %v822 = vsel %vm399, %v762, 0.0
  %823 = vadd.xlane.f32.xlu0 %v822
  %v824 = vpop.xlane.xlu0 %823
  %v825 = vsel %vm399, %v767, 0.0
  %826 = vadd.xlane.f32.xlu0 %v825
  %v827 = vpop.xlane.xlu0 %826
  %v828 = vsel %vm399, %v772, 0.0
  %829 = vadd.xlane.f32.xlu0 %v828
  %v830 = vpop.xlane.xlu0 %829
  %v831 = vsel %vm399, %v777, 0.0
  %832 = vadd.xlane.f32.xlu0 %v831
  %v833 = vpop.xlane.xlu0 %832
  %v834 = vsel %vm399, %v782, 0.0
  %835 = vadd.xlane.f32.xlu0 %v834
  %v836 = vpop.xlane.xlu0 %835
  %v837 = vsel %vm399, %v787, 0.0
  %838 = vadd.xlane.f32.xlu0 %v837
  %v839 = vpop.xlane.xlu0 %838
  %v840 = vsel %vm399, %v792, 0.0
  %841 = vadd.xlane.f32.xlu0 %v840
  %v842 = vpop.xlane.xlu0 %841
  %v843 = vadd.f32 %v448, %v797
  %v844 = vadd.f32 %v449, %v800
  %v845 = vadd.f32 %v450, %v803
  %v846 = vadd.f32 %v451, %v806
  %v847 = vadd.f32 %v452, %v809
  %v848 = vadd.f32 %v453, %v812
  %v849 = vadd.f32 %v454, %v815
  %v850 = vadd.f32 %v455, %v818
  %v851 = vadd.f32 %v456, %v821
  %v852 = vadd.f32 %v457, %v824
  %v853 = vadd.f32 %v458, %v827
  %v854 = vadd.f32 %v459, %v830
  %v855 = vadd.f32 %v460, %v833
  %v856 = vadd.f32 %v461, %v836
  %v857 = vadd.f32 %v462, %v839
  %v858 = vadd.f32 %v463, %v842
  %v859 = vmul.f32 %v717, %v717
  %v860 = vmul.f32 %v722, %v722
  %v861 = vmul.f32 %v727, %v727
  %v862 = vmul.f32 %v732, %v732
  %v863 = vmul.f32 %v737, %v737
  %v864 = vmul.f32 %v742, %v742
  %v865 = vmul.f32 %v747, %v747
  %v866 = vmul.f32 %v752, %v752
  %v867 = vmul.f32 %v757, %v757
  %v868 = vmul.f32 %v762, %v762
  %v869 = vmul.f32 %v767, %v767
  %v870 = vmul.f32 %v772, %v772
  %v871 = vmul.f32 %v777, %v777
  %v872 = vmul.f32 %v782, %v782
  %v873 = vmul.f32 %v787, %v787
  %v874 = vmul.f32 %v792, %v792
  %v875 = vsel %vm399, %v859, 0.0
  %876 = vadd.xlane.f32.xlu0 %v875
  %v877 = vpop.xlane.xlu0 %876
  %v878 = vsel %vm399, %v860, 0.0
  %879 = vadd.xlane.f32.xlu0 %v878
  %v880 = vpop.xlane.xlu0 %879
  %v881 = vsel %vm399, %v861, 0.0
  %882 = vadd.xlane.f32.xlu0 %v881
  %v883 = vpop.xlane.xlu0 %882
  %v884 = vsel %vm399, %v862, 0.0
  %885 = vadd.xlane.f32.xlu0 %v884
  %v886 = vpop.xlane.xlu0 %885
  %v887 = vsel %vm399, %v863, 0.0
  %888 = vadd.xlane.f32.xlu0 %v887
  %v889 = vpop.xlane.xlu0 %888
  %v890 = vsel %vm399, %v864, 0.0
  %891 = vadd.xlane.f32.xlu0 %v890
  %v892 = vpop.xlane.xlu0 %891
  %v893 = vsel %vm399, %v865, 0.0
  %894 = vadd.xlane.f32.xlu0 %v893
  %v895 = vpop.xlane.xlu0 %894
  %v896 = vsel %vm399, %v866, 0.0
  %897 = vadd.xlane.f32.xlu0 %v896
  %v898 = vpop.xlane.xlu0 %897
  %v899 = vsel %vm399, %v867, 0.0
  %900 = vadd.xlane.f32.xlu0 %v899
  %v901 = vpop.xlane.xlu0 %900
  %v902 = vsel %vm399, %v868, 0.0
  %903 = vadd.xlane.f32.xlu0 %v902
  %v904 = vpop.xlane.xlu0 %903
  %v905 = vsel %vm399, %v869, 0.0
  %906 = vadd.xlane.f32.xlu0 %v905
  %v907 = vpop.xlane.xlu0 %906
  %v908 = vsel %vm399, %v870, 0.0
  %909 = vadd.xlane.f32.xlu0 %v908
  %v910 = vpop.xlane.xlu0 %909
  %v911 = vsel %vm399, %v871, 0.0
  %912 = vadd.xlane.f32.xlu0 %v911
  %v913 = vpop.xlane.xlu0 %912
  %v914 = vsel %vm399, %v872, 0.0
  %915 = vadd.xlane.f32.xlu0 %v914
  %v916 = vpop.xlane.xlu0 %915
  %v917 = vsel %vm399, %v873, 0.0
  %918 = vadd.xlane.f32.xlu0 %v917
  %v919 = vpop.xlane.xlu0 %918
  %v920 = vsel %vm399, %v874, 0.0
  %921 = vadd.xlane.f32.xlu0 %v920
  %v922 = vpop.xlane.xlu0 %921
  %v923 = vadd.f32 %v528, %v877
  %v924 = vadd.f32 %v529, %v880
  %v925 = vadd.f32 %v530, %v883
  %v926 = vadd.f32 %v531, %v886
  %v927 = vadd.f32 %v532, %v889
  %v928 = vadd.f32 %v533, %v892
  %v929 = vadd.f32 %v534, %v895
  %v930 = vadd.f32 %v535, %v898
  %v931 = vadd.f32 %v536, %v901
  %v932 = vadd.f32 %v537, %v904
  %v933 = vadd.f32 %v538, %v907
  %v934 = vadd.f32 %v539, %v910
  %v935 = vadd.f32 %v540, %v913
  %v936 = vadd.f32 %v541, %v916
  %v937 = vadd.f32 %v542, %v919
  %v938 = vadd.f32 %v543, %v922
  %v939 = vld [vmem:[%s4] sm:$0xff]
  %v940 = vld [vmem:[%s4 + $0x8] sm:$0xff]
  %v941 = vld [vmem:[%s4 + $0x10] sm:$0xff]
  %v942 = vld [vmem:[%s4 + $0x18] sm:$0xff]
  %v943 = vld [vmem:[%s4 + $0x20] sm:$0xff]
  %v944 = vld [vmem:[%s4 + $0x28] sm:$0xff]
  %v945 = vld [vmem:[%s4 + $0x30] sm:$0xff]
  %v946 = vld [vmem:[%s4 + $0x38] sm:$0xff]
  %v947 = vld [vmem:[%s4 + $0x40] sm:$0xff]
  %v948 = vld [vmem:[%s4 + $0x48] sm:$0xff]
  %v949 = vld [vmem:[%s4 + $0x50] sm:$0xff]
  %v950 = vld [vmem:[%s4 + $0x58] sm:$0xff]
  %v951 = vld [vmem:[%s4 + $0x60] sm:$0xff]
  %v952 = vld [vmem:[%s4 + $0x68] sm:$0xff]
  %v953 = vld [vmem:[%s4 + $0x70] sm:$0xff]
  %v954 = vld [vmem:[%s4 + $0x78] sm:$0xff]
  %v955 = vadd.f32 %v939, %v843
  %v956 = vadd.f32 %v940, %v844
  %v957 = vadd.f32 %v941, %v845
  %v958 = vadd.f32 %v942, %v846
  %v959 = vadd.f32 %v943, %v847
  %v960 = vadd.f32 %v944, %v848
  %v961 = vadd.f32 %v945, %v849
  %v962 = vadd.f32 %v946, %v850
  %v963 = vadd.f32 %v947, %v851
  %v964 = vadd.f32 %v948, %v852
  %v965 = vadd.f32 %v949, %v853
  %v966 = vadd.f32 %v950, %v854
  %v967 = vadd.f32 %v951, %v855
  %v968 = vadd.f32 %v952, %v856
  %v969 = vadd.f32 %v953, %v857
  %v970 = vadd.f32 %v954, %v858
  %vm971 = vcmask 7168
  %972 = vst.msk [vmem:[%s4] sm:$0xff] %vm971, %v955
  %973 = vst.msk [vmem:[%s4 + $0x8] sm:$0xff] %vm971, %v956
  %974 = vst.msk [vmem:[%s4 + $0x10] sm:$0xff] %vm971, %v957
  %975 = vst.msk [vmem:[%s4 + $0x18] sm:$0xff] %vm971, %v958
  %976 = vst.msk [vmem:[%s4 + $0x20] sm:$0xff] %vm971, %v959
  %977 = vst.msk [vmem:[%s4 + $0x28] sm:$0xff] %vm971, %v960
  %978 = vst.msk [vmem:[%s4 + $0x30] sm:$0xff] %vm971, %v961
  %979 = vst.msk [vmem:[%s4 + $0x38] sm:$0xff] %vm971, %v962
  %980 = vst.msk [vmem:[%s4 + $0x40] sm:$0xff] %vm971, %v963
  %981 = vst.msk [vmem:[%s4 + $0x48] sm:$0xff] %vm971, %v964
  %982 = vst.msk [vmem:[%s4 + $0x50] sm:$0xff] %vm971, %v965
  %983 = vst.msk [vmem:[%s4 + $0x58] sm:$0xff] %vm971, %v966
  %984 = vst.msk [vmem:[%s4 + $0x60] sm:$0xff] %vm971, %v967
  %985 = vst.msk [vmem:[%s4 + $0x68] sm:$0xff] %vm971, %v968
  %986 = vst.msk [vmem:[%s4 + $0x70] sm:$0xff] %vm971, %v969
  %987 = vst.msk [vmem:[%s4 + $0x78] sm:$0xff] %vm971, %v970
  %v988 = vld [vmem:[%s5] sm:$0xff]
  %v989 = vld [vmem:[%s5 + $0x8] sm:$0xff]
  %v990 = vld [vmem:[%s5 + $0x10] sm:$0xff]
  %v991 = vld [vmem:[%s5 + $0x18] sm:$0xff]
  %v992 = vld [vmem:[%s5 + $0x20] sm:$0xff]
  %v993 = vld [vmem:[%s5 + $0x28] sm:$0xff]
  %v994 = vld [vmem:[%s5 + $0x30] sm:$0xff]
  %v995 = vld [vmem:[%s5 + $0x38] sm:$0xff]
  %v996 = vld [vmem:[%s5 + $0x40] sm:$0xff]
  %v997 = vld [vmem:[%s5 + $0x48] sm:$0xff]
  %v998 = vld [vmem:[%s5 + $0x50] sm:$0xff]
  %v999 = vld [vmem:[%s5 + $0x58] sm:$0xff]
  %v1000 = vld [vmem:[%s5 + $0x60] sm:$0xff]
  %v1001 = vld [vmem:[%s5 + $0x68] sm:$0xff]
  %v1002 = vld [vmem:[%s5 + $0x70] sm:$0xff]
  %v1003 = vld [vmem:[%s5 + $0x78] sm:$0xff]
  %v1004 = vadd.f32 %v988, %v923
  %v1005 = vadd.f32 %v989, %v924
  %v1006 = vadd.f32 %v990, %v925
  %v1007 = vadd.f32 %v991, %v926
  %v1008 = vadd.f32 %v992, %v927
  %v1009 = vadd.f32 %v993, %v928
  %v1010 = vadd.f32 %v994, %v929
  %v1011 = vadd.f32 %v995, %v930
  %v1012 = vadd.f32 %v996, %v931
  %v1013 = vadd.f32 %v997, %v932
  %v1014 = vadd.f32 %v998, %v933
  %v1015 = vadd.f32 %v999, %v934
  %v1016 = vadd.f32 %v1000, %v935
  %v1017 = vadd.f32 %v1001, %v936
  %v1018 = vadd.f32 %v1002, %v937
  %v1019 = vadd.f32 %v1003, %v938
  %1020 = vst.msk [vmem:[%s5] sm:$0xff] %vm971, %v1004
  %1021 = vst.msk [vmem:[%s5 + $0x8] sm:$0xff] %vm971, %v1005
  %1022 = vst.msk [vmem:[%s5 + $0x10] sm:$0xff] %vm971, %v1006
  %1023 = vst.msk [vmem:[%s5 + $0x18] sm:$0xff] %vm971, %v1007
  %1024 = vst.msk [vmem:[%s5 + $0x20] sm:$0xff] %vm971, %v1008
  %1025 = vst.msk [vmem:[%s5 + $0x28] sm:$0xff] %vm971, %v1009
  %1026 = vst.msk [vmem:[%s5 + $0x30] sm:$0xff] %vm971, %v1010
  %1027 = vst.msk [vmem:[%s5 + $0x38] sm:$0xff] %vm971, %v1011
  %1028 = vst.msk [vmem:[%s5 + $0x40] sm:$0xff] %vm971, %v1012
  %1029 = vst.msk [vmem:[%s5 + $0x48] sm:$0xff] %vm971, %v1013
  %1030 = vst.msk [vmem:[%s5 + $0x50] sm:$0xff] %vm971, %v1014
  %1031 = vst.msk [vmem:[%s5 + $0x58] sm:$0xff] %vm971, %v1015
  %1032 = vst.msk [vmem:[%s5 + $0x60] sm:$0xff] %vm971, %v1016
  %1033 = vst.msk [vmem:[%s5 + $0x68] sm:$0xff] %vm971, %v1017
  %1034 = vst.msk [vmem:[%s5 + $0x70] sm:$0xff] %vm971, %v1018
  %1035 = vst.msk [vmem:[%s5 + $0x78] sm:$0xff] %vm971, %v1019
  // Predicated region
  $region22: #{resblock_forward.4} parent=0 // pred_check
    _
  $region23: #{resblock_forward.4} parent=0 // pred_check_branch
    %1037 = sbr.rel (0) target = $region25
  $region24: #{resblock_forward.4} parent=0 // pred_region
    _
  $region25: #{resblock_forward.4} parent=0 // pred_fallthru
    _
  // Predicated region
  $region26: #{resblock_forward.4} parent=0 // pred_check
    _
  $region27: #{resblock_forward.4} parent=0 // pred_check_branch
    %1039 = sbr.rel (0) target = $region29
  $region28: #{resblock_forward.4} parent=0 // pred_region
    _
  $region29: #{resblock_forward.4} parent=0 // pred_fallthru
    _
  // Predicated region
  $region30: #{resblock_forward.4} parent=0 // pred_check
    _
  $region31: #{resblock_forward.4} parent=0 // pred_check_branch
    %1041 = sbr.rel (0) target = $region33
  $region32: #{resblock_forward.4} parent=0 // pred_region
    _
  $region33: #{resblock_forward.4} parent=0 // pred_fallthru
    _
  // Predicated region
  $region34: #{resblock_forward.4} parent=0 // pred_check
    _
  $region35: #{resblock_forward.4} parent=0 // pred_check_branch
    %1043 = sbr.rel (0) target = $region37
  $region36: #{resblock_forward.4} parent=0 // pred_region
    _
  $region37: #{resblock_forward.4} parent=0 // pred_fallthru
    _

// kernel: resblock_forward.5
$region0: #{resblock_forward.5}
  #allocation0 [shape = 'u32[]', space=smem, size = 0x4, offset = 0x4, fixed_abs, tag = 'smem constant byte address 0x4 - core index']
  #allocation1 [shape = 'u32[144,128]{1,0:T(1,128)}', space=vmem, size = 0x12000, scoped, tag = 'internal scratch']
  %s0 = inlined_call_operand.vmem [shape: f32[2,128,64], index: 0, kind: input, shape index: {}]
  %s1 = inlined_call_operand.vmem [shape: f32[32,128], index: 1, kind: input, shape index: {}]
  %s2 = inlined_call_operand.vmem [shape: f32[32,1], index: 2, kind: input, shape index: {}]
  %s3 = inlined_call_operand.vmem [shape: f32[128,32], index: 3, kind: input, shape index: {}]
  %s4 = inlined_call_operand.vmem [shape: f32[128,1], index: 4, kind: input, shape index: {}]
  %s5 = inlined_call_operand.vmem [shape: f32[2,128,64], index: 5, kind: output, shape index: {}]
  %s6 = sld [smem:[#allocation0]]
  $region30: #{resblock_forward.5} parent=0
    _
  %s8 = ssub.s32 1, %s6
  %s9 = scalar_select 0, %s8, %s6
  // Predicated region
  $region2: #{resblock_forward.5} parent=0 // pred_check
    _
  $region3: #{resblock_forward.5} parent=0 // pred_check_branch
    %11 = sbr.rel (0) target = $region5
  $region4: #{resblock_forward.5} parent=0 // pred_region
    _
  $region5: #{resblock_forward.5} parent=0 // pred_fallthru
    _
  // Predicated region
  $region6: #{resblock_forward.5} parent=0 // pred_check
    _
  $region7: #{resblock_forward.5} parent=0 // pred_check_branch
    %13 = sbr.rel (0) target = $region9
  $region8: #{resblock_forward.5} parent=0 // pred_region
    _
  $region9: #{resblock_forward.5} parent=0 // pred_fallthru
    _
  // Predicated region
  $region10: #{resblock_forward.5} parent=0 // pred_check
    _
  $region11: #{resblock_forward.5} parent=0 // pred_check_branch
    %15 = sbr.rel (0) target = $region13
  $region12: #{resblock_forward.5} parent=0 // pred_region
    _
  $region13: #{resblock_forward.5} parent=0 // pred_fallthru
    _
  // Predicated region
  $region14: #{resblock_forward.5} parent=0 // pred_check
    _
  $region15: #{resblock_forward.5} parent=0 // pred_check_branch
    %17 = sbr.rel (0) target = $region17
  $region16: #{resblock_forward.5} parent=0 // pred_region
    _
  $region17: #{resblock_forward.5} parent=0 // pred_fallthru
    _
  // Predicated region
  $region18: #{resblock_forward.5} parent=0 // pred_check
    _
  $region19: #{resblock_forward.5} parent=0 // pred_check_branch
    %19 = sbr.rel (0) target = $region21
  $region20: #{resblock_forward.5} parent=0 // pred_region
    _
  $region21: #{resblock_forward.5} parent=0 // pred_fallthru
    _
  %v20 = vld [vmem:[%s0] sm:$0xff]
  %v21 = vld [vmem:[%s0 + $0x8] sm:$0xff]
  %v22 = vld [vmem:[%s0 + $0x10] sm:$0xff]
  %v23 = vld [vmem:[%s0 + $0x18] sm:$0xff]
  %v24 = vld [vmem:[%s0 + $0x20] sm:$0xff]
  %v25 = vld [vmem:[%s0 + $0x28] sm:$0xff]
  %v26 = vld [vmem:[%s0 + $0x30] sm:$0xff]
  %v27 = vld [vmem:[%s0 + $0x38] sm:$0xff]
  %v28 = vld [vmem:[%s0 + $0x40] sm:$0xff]
  %v29 = vld [vmem:[%s0 + $0x48] sm:$0xff]
  %v30 = vld [vmem:[%s0 + $0x50] sm:$0xff]
  %v31 = vld [vmem:[%s0 + $0x58] sm:$0xff]
  %v32 = vld [vmem:[%s0 + $0x60] sm:$0xff]
  %v33 = vld [vmem:[%s0 + $0x68] sm:$0xff]
  %v34 = vld [vmem:[%s0 + $0x70] sm:$0xff]
  %v35 = vld [vmem:[%s0 + $0x78] sm:$0xff]
  %v36 = vld [vmem:[%s1] sm:$0xff]
  %v37 = vld [vmem:[%s1 + $0x8] sm:$0xff]
  %v38 = vld [vmem:[%s1 + $0x10] sm:$0xff]
  %v39 = vld [vmem:[%s1 + $0x18] sm:$0xff]
  %v40 = vld [vmem:[%s2] sm:$0xff]
  %v41 = vld [vmem:[%s2 + $0x8] sm:$0xff]
  %v42 = vld [vmem:[%s2 + $0x10] sm:$0xff]
  %v43 = vld [vmem:[%s2 + $0x18] sm:$0xff]
  %45 = vset.pattern.permute.xlu0 0
  %46 = vperm.xlu0 %45, %v40
  %v47 = vpop.permute.xlu0 %46
  %50 = vset.pattern.permute.xlu0 0
  %51 = vperm.xlu0 %50, %v41
  %v52 = vpop.permute.xlu0 %51
  %55 = vset.pattern.permute.xlu0 0
  %56 = vperm.xlu0 %55, %v42
  %v57 = vpop.permute.xlu0 %56
  %60 = vset.pattern.permute.xlu0 0
  %61 = vperm.xlu0 %60, %v43
  %v62 = vpop.permute.xlu0 %61
  %64 = vmatprep.subr.mxu0 0.0
  %65 = vmatpush1.msra.mxu0 %v35
  %66 = vmatprep.subr.mxu0 0.0
  %67 = vmatpush1.msra.mxu0 %v34
  %68 = vmatprep.subr.mxu0 0.0
  %69 = vmatpush1.msra.mxu0 %v33
  %70 = vmatprep.subr.mxu0 0.0
  %71 = vmatpush1.msra.mxu0 %v32
  %72 = vmatprep.subr.mxu0 0.0
  %73 = vmatpush1.msra.mxu0 %v31
  %74 = vmatprep.subr.mxu0 0.0
  %75 = vmatpush1.msra.mxu0 %v30
  %76 = vmatprep.subr.mxu0 0.0
  %77 = vmatpush1.msra.mxu0 %v29
  %78 = vmatprep.subr.mxu0 0.0
  %79 = vmatpush1.msra.mxu0 %v28
  %80 = vmatprep.subr.mxu0 0.0
  %81 = vmatpush1.msra.mxu0 %v27
  %82 = vmatprep.subr.mxu0 0.0
  %83 = vmatpush1.msra.mxu0 %v26
  %84 = vmatprep.subr.mxu0 0.0
  %85 = vmatpush1.msra.mxu0 %v25
  %86 = vmatprep.subr.mxu0 0.0
  %87 = vmatpush1.msra.mxu0 %v24
  %88 = vmatprep.subr.mxu0 0.0
  %89 = vmatpush1.msra.mxu0 %v23
  %90 = vmatprep.subr.mxu0 0.0
  %91 = vmatpush1.msra.mxu0 %v22
  %92 = vmatprep.subr.mxu0 0.0
  %93 = vmatpush1.msra.mxu0 %v21
  %94 = vmatprep.subr.mxu0 0.0
  %95 = vmatpush1.msra.mxu0 %v20
  %96 = vmatprep.subr.mxu0 0.0
  %97 = vmatpush2.msra.mxu0 0.0
  %98 = vmatprep.subr.mxu0 0.0
  %99 = vmatpush2.msra.mxu0 0.0
  %100 = vmatprep.subr.mxu0 0.0
  %101 = vmatpush2.msra.mxu0 0.0
  %102 = vmatprep.subr.mxu0 0.0
  %103 = vmatpush2.msra.mxu0 0.0
  %104 = vmatprep.subr.mxu0 0.0
  %105 = vmatpush2.msra.mxu0 0.0
  %106 = vmatprep.subr.mxu0 0.0
  %107 = vmatpush2.msra.mxu0 0.0
  %108 = vmatprep.subr.mxu0 0.0
  %109 = vmatpush2.msra.mxu0 0.0
  %110 = vmatprep.subr.mxu0 0.0
  %111 = vmatpush2.msra.mxu0 0.0
  %112 = vmatprep.subr.mxu0 0.0
  %113 = vmatpush2.msra.mxu0 0.0
  %114 = vmatprep.subr.mxu0 0.0
  %115 = vmatpush2.msra.mxu0 0.0
  %116 = vmatprep.subr.mxu0 0.0
  %117 = vmatpush2.msra.mxu0 0.0
  %118 = vmatprep.subr.mxu0 0.0
  %119 = vmatpush2.msra.mxu0 0.0
  %120 = vmatprep.subr.mxu0 0.0
  %121 = vmatpush2.msra.mxu0 0.0
  %122 = vmatprep.subr.mxu0 0.0
  %123 = vmatpush2.msra.mxu0 0.0
  %124 = vmatprep.subr.mxu0 0.0
  %125 = vmatpush2.msra.mxu0 0.0
  %126 = vmatprep.subr.mxu0 0.0
  %127 = vmatpush2.msra.mxu0 0.0
  %128 = vmatprep.mubr.f32.mxu0 0.0
  %129 = vmatmul.mubr.f32.gmra.mxu0 %v36
  %v130 = vpop.f32.mrf.mxu0
  %v131 = vadd.f32 %v47, %v130
  %v132 = vpop.f32.mrf.mxu0
  %133 = vmatprep.mubr.f32.mxu0 0.0
  %134 = vmatmul.mubr.f32.gmra.mxu0 %v37
  %v135 = vpop.f32.mrf.mxu0
  %v136 = vadd.f32 %v52, %v135
  %v137 = vpop.f32.mrf.mxu0
  %138 = vmatprep.mubr.f32.mxu0 0.0
  %139 = vmatmul.mubr.f32.gmra.mxu0 %v38
  %v140 = vpop.f32.mrf.mxu0
  %v141 = vadd.f32 %v57, %v140
  %v142 = vpop.f32.mrf.mxu0
  %143 = vmatprep.mubr.f32.mxu0 0.0
  %144 = vmatmul.mubr.f32.gmra.mxu0 %v39
  %v145 = vpop.f32.mrf.mxu0
  %v146 = vadd.f32 %v62, %v145
  %v147 = vpop.f32.mrf.mxu0
  %148 = vdwg.mxu0
  %v149 = vmax.f32 %v131, 0.0
  %v150 = vmax.f32 %v136, 0.0
  %v151 = vmax.f32 %v141, 0.0
  %v152 = vmax.f32 %v146, 0.0
  %v153 = vld [vmem:[%s3] sm:$0xff]
  %v154 = vld [vmem:[%s3 + $0x8] sm:$0xff]
  %v155 = vld [vmem:[%s3 + $0x10] sm:$0xff]
  %v156 = vld [vmem:[%s3 + $0x18] sm:$0xff]
  %v157 = vld [vmem:[%s3 + $0x20] sm:$0xff]
  %v158 = vld [vmem:[%s3 + $0x28] sm:$0xff]
  %v159 = vld [vmem:[%s3 + $0x30] sm:$0xff]
  %v160 = vld [vmem:[%s3 + $0x38] sm:$0xff]
  %v161 = vld [vmem:[%s3 + $0x40] sm:$0xff]
  %v162 = vld [vmem:[%s3 + $0x48] sm:$0xff]
  %v163 = vld [vmem:[%s3 + $0x50] sm:$0xff]
  %v164 = vld [vmem:[%s3 + $0x58] sm:$0xff]
  %v165 = vld [vmem:[%s3 + $0x60] sm:$0xff]
  %v166 = vld [vmem:[%s3 + $0x68] sm:$0xff]
  %v167 = vld [vmem:[%s3 + $0x70] sm:$0xff]
  %v168 = vld [vmem:[%s3 + $0x78] sm:$0xff]
  %v169 = vld [vmem:[%s4] sm:$0xff]
  %v170 = vld [vmem:[%s4 + $0x8] sm:$0xff]
  %v171 = vld [vmem:[%s4 + $0x10] sm:$0xff]
  %v172 = vld [vmem:[%s4 + $0x18] sm:$0xff]
  %v173 = vld [vmem:[%s4 + $0x20] sm:$0xff]
  %v174 = vld [vmem:[%s4 + $0x28] sm:$0xff]
  %v175 = vld [vmem:[%s4 + $0x30] sm:$0xff]
  %v176 = vld [vmem:[%s4 + $0x38] sm:$0xff]
  %v177 = vld [vmem:[%s4 + $0x40] sm:$0xff]
  %v178 = vld [vmem:[%s4 + $0x48] sm:$0xff]
  %v179 = vld [vmem:[%s4 + $0x50] sm:$0xff]
  %v180 = vld [vmem:[%s4 + $0x58] sm:$0xff]
  %v181 = vld [vmem:[%s4 + $0x60] sm:$0xff]
  %v182 = vld [vmem:[%s4 + $0x68] sm:$0xff]
  %v183 = vld [vmem:[%s4 + $0x70] sm:$0xff]
  %v184 = vld [vmem:[%s4 + $0x78] sm:$0xff]
  %186 = vset.pattern.permute.xlu0 0
  %187 = vperm.xlu0 %186, %v169
  %v188 = vpop.permute.xlu0 %187
  %191 = vset.pattern.permute.xlu0 0
  %192 = vperm.xlu0 %191, %v170
  %v193 = vpop.permute.xlu0 %192
  %196 = vset.pattern.permute.xlu0 0
  %197 = vperm.xlu0 %196, %v171
  %v198 = vpop.permute.xlu0 %197
  %201 = vset.pattern.permute.xlu0 0
  %202 = vperm.xlu0 %201, %v172
  %v203 = vpop.permute.xlu0 %202
  %206 = vset.pattern.permute.xlu0 0
  %207 = vperm.xlu0 %206, %v173
  %v208 = vpop.permute.xlu0 %207
  %211 = vset.pattern.permute.xlu0 0
  %212 = vperm.xlu0 %211, %v174
  %v213 = vpop.permute.xlu0 %212
  %216 = vset.pattern.permute.xlu0 0
  %217 = vperm.xlu0 %216, %v175
  %v218 = vpop.permute.xlu0 %217
  %221 = vset.pattern.permute.xlu0 0
  %222 = vperm.xlu0 %221, %v176
  %v223 = vpop.permute.xlu0 %222
  %226 = vset.pattern.permute.xlu0 0
  %227 = vperm.xlu0 %226, %v177
  %v228 = vpop.permute.xlu0 %227
  %231 = vset.pattern.permute.xlu0 0
  %232 = vperm.xlu0 %231, %v178
  %v233 = vpop.permute.xlu0 %232
  %236 = vset.pattern.permute.xlu0 0
  %237 = vperm.xlu0 %236, %v179
  %v238 = vpop.permute.xlu0 %237
  %241 = vset.pattern.permute.xlu0 0
  %242 = vperm.xlu0 %241, %v180
  %v243 = vpop.permute.xlu0 %242
  %246 = vset.pattern.permute.xlu0 0
  %247 = vperm.xlu0 %246, %v181
  %v248 = vpop.permute.xlu0 %247
  %251 = vset.pattern.permute.xlu0 0
  %252 = vperm.xlu0 %251, %v182
  %v253 = vpop.permute.xlu0 %252
  %256 = vset.pattern.permute.xlu0 0
  %257 = vperm.xlu0 %256, %v183
  %v258 = vpop.permute.xlu0 %257
  %261 = vset.pattern.permute.xlu0 0
  %262 = vperm.xlu0 %261, %v184
  %v263 = vpop.permute.xlu0 %262
  %vm265 = vcmask 261120
  %v267 = vsel %vm265, %v153, 0
  %v270 = vsel %vm265, %v154, 0
  %v273 = vsel %vm265, %v155, 0
  %v276 = vsel %vm265, %v156, 0
  %v279 = vsel %vm265, %v157, 0
  %v282 = vsel %vm265, %v158, 0
  %v285 = vsel %vm265, %v159, 0
  %v288 = vsel %vm265, %v160, 0
  %v291 = vsel %vm265, %v161, 0
  %v294 = vsel %vm265, %v162, 0
  %v297 = vsel %vm265, %v163, 0
  %v300 = vsel %vm265, %v164, 0
  %v303 = vsel %vm265, %v165, 0
  %v306 = vsel %vm265, %v166, 0
  %v309 = vsel %vm265, %v167, 0
  %v312 = vsel %vm265, %v168, 0
  %314 = vmatprep.subr.mxu0 0.0
  %315 = vmatpush1.msra.mxu0 0.0
  %316 = vmatprep.subr.mxu0 0.0
  %317 = vmatpush1.msra.mxu0 0.0
  %318 = vmatprep.subr.mxu0 0.0
  %319 = vmatpush1.msra.mxu0 0.0
  %320 = vmatprep.subr.mxu0 0.0
  %321 = vmatpush1.msra.mxu0 0.0
  %322 = vmatprep.subr.mxu0 0.0
  %323 = vmatpush1.msra.mxu0 0.0
  %324 = vmatprep.subr.mxu0 0.0
  %325 = vmatpush1.msra.mxu0 0.0
  %326 = vmatprep.subr.mxu0 0.0
  %327 = vmatpush1.msra.mxu0 0.0
  %328 = vmatprep.subr.mxu0 0.0
  %329 = vmatpush1.msra.mxu0 0.0
  %330 = vmatprep.subr.mxu0 0.0
  %331 = vmatpush1.msra.mxu0 0.0
  %332 = vmatprep.subr.mxu0 0.0
  %333 = vmatpush1.msra.mxu0 0.0
  %334 = vmatprep.subr.mxu0 0.0
  %335 = vmatpush1.msra.mxu0 0.0
  %336 = vmatprep.subr.mxu0 0.0
  %337 = vmatpush1.msra.mxu0 0.0
  %338 = vmatprep.subr.mxu0 0.0
  %339 = vmatpush1.msra.mxu0 %v152
  %340 = vmatprep.subr.mxu0 0.0
  %341 = vmatpush1.msra.mxu0 %v151
  %342 = vmatprep.subr.mxu0 0.0
  %343 = vmatpush1.msra.mxu0 %v150
  %344 = vmatprep.subr.mxu0 0.0
  %345 = vmatpush1.msra.mxu0 %v149
  %346 = vmatprep.subr.mxu0 0.0
  %347 = vmatpush2.msra.mxu0 0.0
  %348 = vmatprep.subr.mxu0 0.0
  %349 = vmatpush2.msra.mxu0 0.0
  %350 = vmatprep.subr.mxu0 0.0
  %351 = vmatpush2.msra.mxu0 0.0
  %352 = vmatprep.subr.mxu0 0.0
  %353 = vmatpush2.msra.mxu0 0.0
  %354 = vmatprep.subr.mxu0 0.0
  %355 = vmatpush2.msra.mxu0 0.0
  %356 = vmatprep.subr.mxu0 0.0
  %357 = vmatpush2.msra.mxu0 0.0
  %358 = vmatprep.subr.mxu0 0.0
  %359 = vmatpush2.msra.mxu0 0.0
  %360 = vmatprep.subr.mxu0 0.0
  %361 = vmatpush2.msra.mxu0 0.0
  %362 = vmatprep.subr.mxu0 0.0
  %363 = vmatpush2.msra.mxu0 0.0
  %364 = vmatprep.subr.mxu0 0.0
  %365 = vmatpush2.msra.mxu0 0.0
  %366 = vmatprep.subr.mxu0 0.0
  %367 = vmatpush2.msra.mxu0 0.0
  %368 = vmatprep.subr.mxu0 0.0
  %369 = vmatpush2.msra.mxu0 0.0
  %370 = vmatprep.subr.mxu0 0.0
  %371 = vmatpush2.msra.mxu0 0.0
  %372 = vmatprep.subr.mxu0 0.0
  %373 = vmatpush2.msra.mxu0 0.0
  %374 = vmatprep.subr.mxu0 0.0
  %375 = vmatpush2.msra.mxu0 0.0
  %376 = vmatprep.subr.mxu0 0.0
  %377 = vmatpush2.msra.mxu0 0.0
  %378 = vmatprep.mubr.f32.mxu0 0.0
  %379 = vmatmul.mubr.f32.gmra.mxu0 %v267
  %v380 = vpop.f32.mrf.mxu0
  %v381 = vadd.f32 %v188, %v380
  %v382 = vpop.f32.mrf.mxu0
  %383 = vmatprep.mubr.f32.mxu0 0.0
  %384 = vmatmul.mubr.f32.gmra.mxu0 %v270
  %v385 = vpop.f32.mrf.mxu0
  %v386 = vadd.f32 %v193, %v385
  %v387 = vpop.f32.mrf.mxu0
  %388 = vmatprep.mubr.f32.mxu0 0.0
  %389 = vmatmul.mubr.f32.gmra.mxu0 %v273
  %v390 = vpop.f32.mrf.mxu0
  %v391 = vadd.f32 %v198, %v390
  %v392 = vpop.f32.mrf.mxu0
  %393 = vmatprep.mubr.f32.mxu0 0.0
  %394 = vmatmul.mubr.f32.gmra.mxu0 %v276
  %v395 = vpop.f32.mrf.mxu0
  %v396 = vadd.f32 %v203, %v395
  %v397 = vpop.f32.mrf.mxu0
  %398 = vmatprep.mubr.f32.mxu0 0.0
  %399 = vmatmul.mubr.f32.gmra.mxu0 %v279
  %v400 = vpop.f32.mrf.mxu0
  %v401 = vadd.f32 %v208, %v400
  %v402 = vpop.f32.mrf.mxu0
  %403 = vmatprep.mubr.f32.mxu0 0.0
  %404 = vmatmul.mubr.f32.gmra.mxu0 %v282
  %v405 = vpop.f32.mrf.mxu0
  %v406 = vadd.f32 %v213, %v405
  %v407 = vpop.f32.mrf.mxu0
  %408 = vmatprep.mubr.f32.mxu0 0.0
  %409 = vmatmul.mubr.f32.gmra.mxu0 %v285
  %v410 = vpop.f32.mrf.mxu0
  %v411 = vadd.f32 %v218, %v410
  %v412 = vpop.f32.mrf.mxu0
  %413 = vmatprep.mubr.f32.mxu0 0.0
  %414 = vmatmul.mubr.f32.gmra.mxu0 %v288
  %v415 = vpop.f32.mrf.mxu0
  %v416 = vadd.f32 %v223, %v415
  %v417 = vpop.f32.mrf.mxu0
  %418 = vmatprep.mubr.f32.mxu0 0.0
  %419 = vmatmul.mubr.f32.gmra.mxu0 %v291
  %v420 = vpop.f32.mrf.mxu0
  %v421 = vadd.f32 %v228, %v420
  %v422 = vpop.f32.mrf.mxu0
  %423 = vmatprep.mubr.f32.mxu0 0.0
  %424 = vmatmul.mubr.f32.gmra.mxu0 %v294
  %v425 = vpop.f32.mrf.mxu0
  %v426 = vadd.f32 %v233, %v425
  %v427 = vpop.f32.mrf.mxu0
  %428 = vmatprep.mubr.f32.mxu0 0.0
  %429 = vmatmul.mubr.f32.gmra.mxu0 %v297
  %v430 = vpop.f32.mrf.mxu0
  %v431 = vadd.f32 %v238, %v430
  %v432 = vpop.f32.mrf.mxu0
  %433 = vmatprep.mubr.f32.mxu0 0.0
  %434 = vmatmul.mubr.f32.gmra.mxu0 %v300
  %v435 = vpop.f32.mrf.mxu0
  %v436 = vadd.f32 %v243, %v435
  %v437 = vpop.f32.mrf.mxu0
  %438 = vmatprep.mubr.f32.mxu0 0.0
  %439 = vmatmul.mubr.f32.gmra.mxu0 %v303
  %v440 = vpop.f32.mrf.mxu0
  %v441 = vadd.f32 %v248, %v440
  %v442 = vpop.f32.mrf.mxu0
  %443 = vmatprep.mubr.f32.mxu0 0.0
  %444 = vmatmul.mubr.f32.gmra.mxu0 %v306
  %v445 = vpop.f32.mrf.mxu0
  %v446 = vadd.f32 %v253, %v445
  %v447 = vpop.f32.mrf.mxu0
  %448 = vmatprep.mubr.f32.mxu0 0.0
  %449 = vmatmul.mubr.f32.gmra.mxu0 %v309
  %v450 = vpop.f32.mrf.mxu0
  %v451 = vadd.f32 %v258, %v450
  %v452 = vpop.f32.mrf.mxu0
  %453 = vmatprep.mubr.f32.mxu0 0.0
  %454 = vmatmul.mubr.f32.gmra.mxu0 %v312
  %v455 = vpop.f32.mrf.mxu0
  %v456 = vadd.f32 %v263, %v455
  %v457 = vpop.f32.mrf.mxu0
  %458 = vdwg.mxu0
  %v459 = vadd.f32 %v381, %v20
  %v460 = vadd.f32 %v386, %v21
  %v461 = vadd.f32 %v391, %v22
  %v462 = vadd.f32 %v396, %v23
  %v463 = vadd.f32 %v401, %v24
  %v464 = vadd.f32 %v406, %v25
  %v465 = vadd.f32 %v411, %v26
  %v466 = vadd.f32 %v416, %v27
  %v467 = vadd.f32 %v421, %v28
  %v468 = vadd.f32 %v426, %v29
  %v469 = vadd.f32 %v431, %v30
  %v470 = vadd.f32 %v436, %v31
  %v471 = vadd.f32 %v441, %v32
  %v472 = vadd.f32 %v446, %v33
  %v473 = vadd.f32 %v451, %v34
  %v474 = vadd.f32 %v456, %v35
  %v475 = vmax.f32 %v459, 0.0
  %v476 = vmax.f32 %v460, 0.0
  %v477 = vmax.f32 %v461, 0.0
  %v478 = vmax.f32 %v462, 0.0
  %v479 = vmax.f32 %v463, 0.0
  %v480 = vmax.f32 %v464, 0.0
  %v481 = vmax.f32 %v465, 0.0
  %v482 = vmax.f32 %v466, 0.0
  %v483 = vmax.f32 %v467, 0.0
  %v484 = vmax.f32 %v468, 0.0
  %v485 = vmax.f32 %v469, 0.0
  %v486 = vmax.f32 %v470, 0.0
  %v487 = vmax.f32 %v471, 0.0
  %v488 = vmax.f32 %v472, 0.0
  %v489 = vmax.f32 %v473, 0.0
  %v490 = vmax.f32 %v474, 0.0
  %vm491 = vcmask 523264
  %492 = vst.msk [vmem:[%s5] sm:$0xff] %vm491, %v475
  %493 = vst.msk [vmem:[%s5 + $0x8] sm:$0xff] %vm491, %v476
  %494 = vst.msk [vmem:[%s5 + $0x10] sm:$0xff] %vm491, %v477
  %495 = vst.msk [vmem:[%s5 + $0x18] sm:$0xff] %vm491, %v478
  %496 = vst.msk [vmem:[%s5 + $0x20] sm:$0xff] %vm491, %v479
  %497 = vst.msk [vmem:[%s5 + $0x28] sm:$0xff] %vm491, %v480
  %498 = vst.msk [vmem:[%s5 + $0x30] sm:$0xff] %vm491, %v481
  %499 = vst.msk [vmem:[%s5 + $0x38] sm:$0xff] %vm491, %v482
  %500 = vst.msk [vmem:[%s5 + $0x40] sm:$0xff] %vm491, %v483
  %501 = vst.msk [vmem:[%s5 + $0x48] sm:$0xff] %vm491, %v484
  %502 = vst.msk [vmem:[%s5 + $0x50] sm:$0xff] %vm491, %v485
  %503 = vst.msk [vmem:[%s5 + $0x58] sm:$0xff] %vm491, %v486
  %504 = vst.msk [vmem:[%s5 + $0x60] sm:$0xff] %vm491, %v487
  %505 = vst.msk [vmem:[%s5 + $0x68] sm:$0xff] %vm491, %v488
  %506 = vst.msk [vmem:[%s5 + $0x70] sm:$0xff] %vm491, %v489
  %507 = vst.msk [vmem:[%s5 + $0x78] sm:$0xff] %vm491, %v490
  %s508 = scalar_lea.vmem %s0, 128
  %v509 = vld [vmem:[%s508] sm:$0xff]
  %v510 = vld [vmem:[%s508 + $0x8] sm:$0xff]
  %v511 = vld [vmem:[%s508 + $0x10] sm:$0xff]
  %v512 = vld [vmem:[%s508 + $0x18] sm:$0xff]
  %v513 = vld [vmem:[%s508 + $0x20] sm:$0xff]
  %v514 = vld [vmem:[%s508 + $0x28] sm:$0xff]
  %v515 = vld [vmem:[%s508 + $0x30] sm:$0xff]
  %v516 = vld [vmem:[%s508 + $0x38] sm:$0xff]
  %v517 = vld [vmem:[%s508 + $0x40] sm:$0xff]
  %v518 = vld [vmem:[%s508 + $0x48] sm:$0xff]
  %v519 = vld [vmem:[%s508 + $0x50] sm:$0xff]
  %v520 = vld [vmem:[%s508 + $0x58] sm:$0xff]
  %v521 = vld [vmem:[%s508 + $0x60] sm:$0xff]
  %v522 = vld [vmem:[%s508 + $0x68] sm:$0xff]
  %v523 = vld [vmem:[%s508 + $0x70] sm:$0xff]
  %v524 = vld [vmem:[%s508 + $0x78] sm:$0xff]
  %v525 = vld [vmem:[%s1] sm:$0xff]
  %v526 = vld [vmem:[%s1 + $0x8] sm:$0xff]
  %v527 = vld [vmem:[%s1 + $0x10] sm:$0xff]
  %v528 = vld [vmem:[%s1 + $0x18] sm:$0xff]
  %v529 = vld [vmem:[%s2] sm:$0xff]
  %v530 = vld [vmem:[%s2 + $0x8] sm:$0xff]
  %v531 = vld [vmem:[%s2 + $0x10] sm:$0xff]
  %v532 = vld [vmem:[%s2 + $0x18] sm:$0xff]
  %534 = vset.pattern.permute.xlu0 0
  %535 = vperm.xlu0 %534, %v529
  %v536 = vpop.permute.xlu0 %535
  %539 = vset.pattern.permute.xlu0 0
  %540 = vperm.xlu0 %539, %v530
  %v541 = vpop.permute.xlu0 %540
  %544 = vset.pattern.permute.xlu0 0
  %545 = vperm.xlu0 %544, %v531
  %v546 = vpop.permute.xlu0 %545
  %549 = vset.pattern.permute.xlu0 0
  %550 = vperm.xlu0 %549, %v532
  %v551 = vpop.permute.xlu0 %550
  %553 = vmatprep.subr.mxu0 0.0
  %554 = vmatpush1.msra.mxu0 %v524
  %555 = vmatprep.subr.mxu0 0.0
  %556 = vmatpush1.msra.mxu0 %v523
  %557 = vmatprep.subr.mxu0 0.0
  %558 = vmatpush1.msra.mxu0 %v522
  %559 = vmatprep.subr.mxu0 0.0
  %560 = vmatpush1.msra.mxu0 %v521
  %561 = vmatprep.subr.mxu0 0.0
  %562 = vmatpush1.msra.mxu0 %v520
  %563 = vmatprep.subr.mxu0 0.0
  %564 = vmatpush1.msra.mxu0 %v519
  %565 = vmatprep.subr.mxu0 0.0
  %566 = vmatpush1.msra.mxu0 %v518
  %567 = vmatprep.subr.mxu0 0.0
  %568 = vmatpush1.msra.mxu0 %v517
  %569 = vmatprep.subr.mxu0 0.0
  %570 = vmatpush1.msra.mxu0 %v516
  %571 = vmatprep.subr.mxu0 0.0
  %572 = vmatpush1.msra.mxu0 %v515
  %573 = vmatprep.subr.mxu0 0.0
  %574 = vmatpush1.msra.mxu0 %v514
  %575 = vmatprep.subr.mxu0 0.0
  %576 = vmatpush1.msra.mxu0 %v513
  %577 = vmatprep.subr.mxu0 0.0
  %578 = vmatpush1.msra.mxu0 %v512
  %579 = vmatprep.subr.mxu0 0.0
  %580 = vmatpush1.msra.mxu0 %v511
  %581 = vmatprep.subr.mxu0 0.0
  %582 = vmatpush1.msra.mxu0 %v510
  %583 = vmatprep.subr.mxu0 0.0
  %584 = vmatpush1.msra.mxu0 %v509
  %585 = vmatprep.subr.mxu0 0.0
  %586 = vmatpush2.msra.mxu0 0.0
  %587 = vmatprep.subr.mxu0 0.0
  %588 = vmatpush2.msra.mxu0 0.0
  %589 = vmatprep.subr.mxu0 0.0
  %590 = vmatpush2.msra.mxu0 0.0
  %591 = vmatprep.subr.mxu0 0.0
  %592 = vmatpush2.msra.mxu0 0.0
  %593 = vmatprep.subr.mxu0 0.0
  %594 = vmatpush2.msra.mxu0 0.0
  %595 = vmatprep.subr.mxu0 0.0
  %596 = vmatpush2.msra.mxu0 0.0
  %597 = vmatprep.subr.mxu0 0.0
  %598 = vmatpush2.msra.mxu0 0.0
  %599 = vmatprep.subr.mxu0 0.0
  %600 = vmatpush2.msra.mxu0 0.0
  %601 = vmatprep.subr.mxu0 0.0
  %602 = vmatpush2.msra.mxu0 0.0
  %603 = vmatprep.subr.mxu0 0.0
  %604 = vmatpush2.msra.mxu0 0.0
  %605 = vmatprep.subr.mxu0 0.0
  %606 = vmatpush2.msra.mxu0 0.0
  %607 = vmatprep.subr.mxu0 0.0
  %608 = vmatpush2.msra.mxu0 0.0
  %609 = vmatprep.subr.mxu0 0.0
  %610 = vmatpush2.msra.mxu0 0.0
  %611 = vmatprep.subr.mxu0 0.0
  %612 = vmatpush2.msra.mxu0 0.0
  %613 = vmatprep.subr.mxu0 0.0
  %614 = vmatpush2.msra.mxu0 0.0
  %615 = vmatprep.subr.mxu0 0.0
  %616 = vmatpush2.msra.mxu0 0.0
  %617 = vmatprep.mubr.f32.mxu0 0.0
  %618 = vmatmul.mubr.f32.gmra.mxu0 %v525
  %v619 = vpop.f32.mrf.mxu0
  %v620 = vadd.f32 %v536, %v619
  %v621 = vpop.f32.mrf.mxu0
  %622 = vmatprep.mubr.f32.mxu0 0.0
  %623 = vmatmul.mubr.f32.gmra.mxu0 %v526
  %v624 = vpop.f32.mrf.mxu0
  %v625 = vadd.f32 %v541, %v624
  %v626 = vpop.f32.mrf.mxu0
  %627 = vmatprep.mubr.f32.mxu0 0.0
  %628 = vmatmul.mubr.f32.gmra.mxu0 %v527
  %v629 = vpop.f32.mrf.mxu0
  %v630 = vadd.f32 %v546, %v629
  %v631 = vpop.f32.mrf.mxu0
  %632 = vmatprep.mubr.f32.mxu0 0.0
  %633 = vmatmul.mubr.f32.gmra.mxu0 %v528
  %v634 = vpop.f32.mrf.mxu0
  %v635 = vadd.f32 %v551, %v634
  %v636 = vpop.f32.mrf.mxu0
  %637 = vdwg.mxu0
  %v638 = vmax.f32 %v620, 0.0
  %v639 = vmax.f32 %v625, 0.0
  %v640 = vmax.f32 %v630, 0.0
  %v641 = vmax.f32 %v635, 0.0
  %v642 = vld [vmem:[%s3] sm:$0xff]
  %v643 = vld [vmem:[%s3 + $0x8] sm:$0xff]
  %v644 = vld [vmem:[%s3 + $0x10] sm:$0xff]
  %v645 = vld [vmem:[%s3 + $0x18] sm:$0xff]
  %v646 = vld [vmem:[%s3 + $0x20] sm:$0xff]
  %v647 = vld [vmem:[%s3 + $0x28] sm:$0xff]
  %v648 = vld [vmem:[%s3 + $0x30] sm:$0xff]
  %v649 = vld [vmem:[%s3 + $0x38] sm:$0xff]
  %v650 = vld [vmem:[%s3 + $0x40] sm:$0xff]
  %v651 = vld [vmem:[%s3 + $0x48] sm:$0xff]
  %v652 = vld [vmem:[%s3 + $0x50] sm:$0xff]
  %v653 = vld [vmem:[%s3 + $0x58] sm:$0xff]
  %v654 = vld [vmem:[%s3 + $0x60] sm:$0xff]
  %v655 = vld [vmem:[%s3 + $0x68] sm:$0xff]
  %v656 = vld [vmem:[%s3 + $0x70] sm:$0xff]
  %v657 = vld [vmem:[%s3 + $0x78] sm:$0xff]
  %v658 = vld [vmem:[%s4] sm:$0xff]
  %v659 = vld [vmem:[%s4 + $0x8] sm:$0xff]
  %v660 = vld [vmem:[%s4 + $0x10] sm:$0xff]
  %v661 = vld [vmem:[%s4 + $0x18] sm:$0xff]
  %v662 = vld [vmem:[%s4 + $0x20] sm:$0xff]
  %v663 = vld [vmem:[%s4 + $0x28] sm:$0xff]
  %v664 = vld [vmem:[%s4 + $0x30] sm:$0xff]
  %v665 = vld [vmem:[%s4 + $0x38] sm:$0xff]
  %v666 = vld [vmem:[%s4 + $0x40] sm:$0xff]
  %v667 = vld [vmem:[%s4 + $0x48] sm:$0xff]
  %v668 = vld [vmem:[%s4 + $0x50] sm:$0xff]
  %v669 = vld [vmem:[%s4 + $0x58] sm:$0xff]
  %v670 = vld [vmem:[%s4 + $0x60] sm:$0xff]
  %v671 = vld [vmem:[%s4 + $0x68] sm:$0xff]
  %v672 = vld [vmem:[%s4 + $0x70] sm:$0xff]
  %v673 = vld [vmem:[%s4 + $0x78] sm:$0xff]
  %675 = vset.pattern.permute.xlu0 0
  %676 = vperm.xlu0 %675, %v658
  %v677 = vpop.permute.xlu0 %676
  %680 = vset.pattern.permute.xlu0 0
  %681 = vperm.xlu0 %680, %v659
  %v682 = vpop.permute.xlu0 %681
  %685 = vset.pattern.permute.xlu0 0
  %686 = vperm.xlu0 %685, %v660
  %v687 = vpop.permute.xlu0 %686
  %690 = vset.pattern.permute.xlu0 0
  %691 = vperm.xlu0 %690, %v661
  %v692 = vpop.permute.xlu0 %691
  %695 = vset.pattern.permute.xlu0 0
  %696 = vperm.xlu0 %695, %v662
  %v697 = vpop.permute.xlu0 %696
  %700 = vset.pattern.permute.xlu0 0
  %701 = vperm.xlu0 %700, %v663
  %v702 = vpop.permute.xlu0 %701
  %705 = vset.pattern.permute.xlu0 0
  %706 = vperm.xlu0 %705, %v664
  %v707 = vpop.permute.xlu0 %706
  %710 = vset.pattern.permute.xlu0 0
  %711 = vperm.xlu0 %710, %v665
  %v712 = vpop.permute.xlu0 %711
  %715 = vset.pattern.permute.xlu0 0
  %716 = vperm.xlu0 %715, %v666
  %v717 = vpop.permute.xlu0 %716
  %720 = vset.pattern.permute.xlu0 0
  %721 = vperm.xlu0 %720, %v667
  %v722 = vpop.permute.xlu0 %721
  %725 = vset.pattern.permute.xlu0 0
  %726 = vperm.xlu0 %725, %v668
  %v727 = vpop.permute.xlu0 %726
  %730 = vset.pattern.permute.xlu0 0
  %731 = vperm.xlu0 %730, %v669
  %v732 = vpop.permute.xlu0 %731
  %735 = vset.pattern.permute.xlu0 0
  %736 = vperm.xlu0 %735, %v670
  %v737 = vpop.permute.xlu0 %736
  %740 = vset.pattern.permute.xlu0 0
  %741 = vperm.xlu0 %740, %v671
  %v742 = vpop.permute.xlu0 %741
  %745 = vset.pattern.permute.xlu0 0
  %746 = vperm.xlu0 %745, %v672
  %v747 = vpop.permute.xlu0 %746
  %750 = vset.pattern.permute.xlu0 0
  %751 = vperm.xlu0 %750, %v673
  %v752 = vpop.permute.xlu0 %751
  %v755 = vsel %vm265, %v642, 0
  %v758 = vsel %vm265, %v643, 0
  %v761 = vsel %vm265, %v644, 0
  %v764 = vsel %vm265, %v645, 0
  %v767 = vsel %vm265, %v646, 0
  %v770 = vsel %vm265, %v647, 0
  %v773 = vsel %vm265, %v648, 0
  %v776 = vsel %vm265, %v649, 0
  %v779 = vsel %vm265, %v650, 0
  %v782 = vsel %vm265, %v651, 0
  %v785 = vsel %vm265, %v652, 0
  %v788 = vsel %vm265, %v653, 0
  %v791 = vsel %vm265, %v654, 0
  %v794 = vsel %vm265, %v655, 0
  %v797 = vsel %vm265, %v656, 0
  %v800 = vsel %vm265, %v657, 0
  %802 = vmatprep.subr.mxu0 0.0
  %803 = vmatpush1.msra.mxu0 0.0
  %804 = vmatprep.subr.mxu0 0.0
  %805 = vmatpush1.msra.mxu0 0.0
  %806 = vmatprep.subr.mxu0 0.0
  %807 = vmatpush1.msra.mxu0 0.0
  %808 = vmatprep.subr.mxu0 0.0
  %809 = vmatpush1.msra.mxu0 0.0
  %810 = vmatprep.subr.mxu0 0.0
  %811 = vmatpush1.msra.mxu0 0.0
  %812 = vmatprep.subr.mxu0 0.0
  %813 = vmatpush1.msra.mxu0 0.0
  %814 = vmatprep.subr.mxu0 0.0
  %815 = vmatpush1.msra.mxu0 0.0
  %816 = vmatprep.subr.mxu0 0.0
  %817 = vmatpush1.msra.mxu0 0.0
  %818 = vmatprep.subr.mxu0 0.0
  %819 = vmatpush1.msra.mxu0 0.0
  %820 = vmatprep.subr.mxu0 0.0
  %821 = vmatpush1.msra.mxu0 0.0
  %822 = vmatprep.subr.mxu0 0.0
  %823 = vmatpush1.msra.mxu0 0.0
  %824 = vmatprep.subr.mxu0 0.0
  %825 = vmatpush1.msra.mxu0 0.0
  %826 = vmatprep.subr.mxu0 0.0
  %827 = vmatpush1.msra.mxu0 %v641
  %828 = vmatprep.subr.mxu0 0.0
  %829 = vmatpush1.msra.mxu0 %v640
  %830 = vmatprep.subr.mxu0 0.0
  %831 = vmatpush1.msra.mxu0 %v639
  %832 = vmatprep.subr.mxu0 0.0
  %833 = vmatpush1.msra.mxu0 %v638
  %834 = vmatprep.subr.mxu0 0.0
  %835 = vmatpush2.msra.mxu0 0.0
  %836 = vmatprep.subr.mxu0 0.0
  %837 = vmatpush2.msra.mxu0 0.0
  %838 = vmatprep.subr.mxu0 0.0
  %839 = vmatpush2.msra.mxu0 0.0
  %840 = vmatprep.subr.mxu0 0.0
  %841 = vmatpush2.msra.mxu0 0.0
  %842 = vmatprep.subr.mxu0 0.0
  %843 = vmatpush2.msra.mxu0 0.0
  %844 = vmatprep.subr.mxu0 0.0
  %845 = vmatpush2.msra.mxu0 0.0
  %846 = vmatprep.subr.mxu0 0.0
  %847 = vmatpush2.msra.mxu0 0.0
  %848 = vmatprep.subr.mxu0 0.0
  %849 = vmatpush2.msra.mxu0 0.0
  %850 = vmatprep.subr.mxu0 0.0
  %851 = vmatpush2.msra.mxu0 0.0
  %852 = vmatprep.subr.mxu0 0.0
  %853 = vmatpush2.msra.mxu0 0.0
  %854 = vmatprep.subr.mxu0 0.0
  %855 = vmatpush2.msra.mxu0 0.0
  %856 = vmatprep.subr.mxu0 0.0
  %857 = vmatpush2.msra.mxu0 0.0
  %858 = vmatprep.subr.mxu0 0.0
  %859 = vmatpush2.msra.mxu0 0.0
  %860 = vmatprep.subr.mxu0 0.0
  %861 = vmatpush2.msra.mxu0 0.0
  %862 = vmatprep.subr.mxu0 0.0
  %863 = vmatpush2.msra.mxu0 0.0
  %864 = vmatprep.subr.mxu0 0.0
  %865 = vmatpush2.msra.mxu0 0.0
  %866 = vmatprep.mubr.f32.mxu0 0.0
  %867 = vmatmul.mubr.f32.gmra.mxu0 %v755
  %v868 = vpop.f32.mrf.mxu0
  %v869 = vadd.f32 %v677, %v868
  %v870 = vpop.f32.mrf.mxu0
  %871 = vmatprep.mubr.f32.mxu0 0.0
  %872 = vmatmul.mubr.f32.gmra.mxu0 %v758
  %v873 = vpop.f32.mrf.mxu0
  %v874 = vadd.f32 %v682, %v873
  %v875 = vpop.f32.mrf.mxu0
  %876 = vmatprep.mubr.f32.mxu0 0.0
  %877 = vmatmul.mubr.f32.gmra.mxu0 %v761
  %v878 = vpop.f32.mrf.mxu0
  %v879 = vadd.f32 %v687, %v878
  %v880 = vpop.f32.mrf.mxu0
  %881 = vmatprep.mubr.f32.mxu0 0.0
  %882 = vmatmul.mubr.f32.gmra.mxu0 %v764
  %v883 = vpop.f32.mrf.mxu0
  %v884 = vadd.f32 %v692, %v883
  %v885 = vpop.f32.mrf.mxu0
  %886 = vmatprep.mubr.f32.mxu0 0.0
  %887 = vmatmul.mubr.f32.gmra.mxu0 %v767
  %v888 = vpop.f32.mrf.mxu0
  %v889 = vadd.f32 %v697, %v888
  %v890 = vpop.f32.mrf.mxu0
  %891 = vmatprep.mubr.f32.mxu0 0.0
  %892 = vmatmul.mubr.f32.gmra.mxu0 %v770
  %v893 = vpop.f32.mrf.mxu0
  %v894 = vadd.f32 %v702, %v893
  %v895 = vpop.f32.mrf.mxu0
  %896 = vmatprep.mubr.f32.mxu0 0.0
  %897 = vmatmul.mubr.f32.gmra.mxu0 %v773
  %v898 = vpop.f32.mrf.mxu0
  %v899 = vadd.f32 %v707, %v898
  %v900 = vpop.f32.mrf.mxu0
  %901 = vmatprep.mubr.f32.mxu0 0.0
  %902 = vmatmul.mubr.f32.gmra.mxu0 %v776
  %v903 = vpop.f32.mrf.mxu0
  %v904 = vadd.f32 %v712, %v903
  %v905 = vpop.f32.mrf.mxu0
  %906 = vmatprep.mubr.f32.mxu0 0.0
  %907 = vmatmul.mubr.f32.gmra.mxu0 %v779
  %v908 = vpop.f32.mrf.mxu0
  %v909 = vadd.f32 %v717, %v908
  %v910 = vpop.f32.mrf.mxu0
  %911 = vmatprep.mubr.f32.mxu0 0.0
  %912 = vmatmul.mubr.f32.gmra.mxu0 %v782
  %v913 = vpop.f32.mrf.mxu0
  %v914 = vadd.f32 %v722, %v913
  %v915 = vpop.f32.mrf.mxu0
  %916 = vmatprep.mubr.f32.mxu0 0.0
  %917 = vmatmul.mubr.f32.gmra.mxu0 %v785
  %v918 = vpop.f32.mrf.mxu0
  %v919 = vadd.f32 %v727, %v918
  %v920 = vpop.f32.mrf.mxu0
  %921 = vmatprep.mubr.f32.mxu0 0.0
  %922 = vmatmul.mubr.f32.gmra.mxu0 %v788
  %v923 = vpop.f32.mrf.mxu0
  %v924 = vadd.f32 %v732, %v923
  %v925 = vpop.f32.mrf.mxu0
  %926 = vmatprep.mubr.f32.mxu0 0.0
  %927 = vmatmul.mubr.f32.gmra.mxu0 %v791
  %v928 = vpop.f32.mrf.mxu0
  %v929 = vadd.f32 %v737, %v928
  %v930 = vpop.f32.mrf.mxu0
  %931 = vmatprep.mubr.f32.mxu0 0.0
  %932 = vmatmul.mubr.f32.gmra.mxu0 %v794
  %v933 = vpop.f32.mrf.mxu0
  %v934 = vadd.f32 %v742, %v933
  %v935 = vpop.f32.mrf.mxu0
  %936 = vmatprep.mubr.f32.mxu0 0.0
  %937 = vmatmul.mubr.f32.gmra.mxu0 %v797
  %v938 = vpop.f32.mrf.mxu0
  %v939 = vadd.f32 %v747, %v938
  %v940 = vpop.f32.mrf.mxu0
  %941 = vmatprep.mubr.f32.mxu0 0.0
  %942 = vmatmul.mubr.f32.gmra.mxu0 %v800
  %v943 = vpop.f32.mrf.mxu0
  %v944 = vadd.f32 %v752, %v943
  %v945 = vpop.f32.mrf.mxu0
  %946 = vdwg.mxu0
  %v947 = vadd.f32 %v869, %v509
  %v948 = vadd.f32 %v874, %v510
  %v949 = vadd.f32 %v879, %v511
  %v950 = vadd.f32 %v884, %v512
  %v951 = vadd.f32 %v889, %v513
  %v952 = vadd.f32 %v894, %v514
  %v953 = vadd.f32 %v899, %v515
  %v954 = vadd.f32 %v904, %v516
  %v955 = vadd.f32 %v909, %v517
  %v956 = vadd.f32 %v914, %v518
  %v957 = vadd.f32 %v919, %v519
  %v958 = vadd.f32 %v924, %v520
  %v959 = vadd.f32 %v929, %v521
  %v960 = vadd.f32 %v934, %v522
  %v961 = vadd.f32 %v939, %v523
  %v962 = vadd.f32 %v944, %v524
  %v963 = vmax.f32 %v947, 0.0
  %v964 = vmax.f32 %v948, 0.0
  %v965 = vmax.f32 %v949, 0.0
  %v966 = vmax.f32 %v950, 0.0
  %v967 = vmax.f32 %v951, 0.0
  %v968 = vmax.f32 %v952, 0.0
  %v969 = vmax.f32 %v953, 0.0
  %v970 = vmax.f32 %v954, 0.0
  %v971 = vmax.f32 %v955, 0.0
  %v972 = vmax.f32 %v956, 0.0
  %v973 = vmax.f32 %v957, 0.0
  %v974 = vmax.f32 %v958, 0.0
  %v975 = vmax.f32 %v959, 0.0
  %v976 = vmax.f32 %v960, 0.0
  %v977 = vmax.f32 %v961, 0.0
  %v978 = vmax.f32 %v962, 0.0
  %s979 = scalar_lea.vmem %s5, 128
  %980 = vst.msk [vmem:[%s979] sm:$0xff] %vm491, %v963
  %981 = vst.msk [vmem:[%s979 + $0x8] sm:$0xff] %vm491, %v964
  %982 = vst.msk [vmem:[%s979 + $0x10] sm:$0xff] %vm491, %v965
  %983 = vst.msk [vmem:[%s979 + $0x18] sm:$0xff] %vm491, %v966
  %984 = vst.msk [vmem:[%s979 + $0x20] sm:$0xff] %vm491, %v967
  %985 = vst.msk [vmem:[%s979 + $0x28] sm:$0xff] %vm491, %v968
  %986 = vst.msk [vmem:[%s979 + $0x30] sm:$0xff] %vm491, %v969
  %987 = vst.msk [vmem:[%s979 + $0x38] sm:$0xff] %vm491, %v970
  %988 = vst.msk [vmem:[%s979 + $0x40] sm:$0xff] %vm491, %v971
  %989 = vst.msk [vmem:[%s979 + $0x48] sm:$0xff] %vm491, %v972
  %990 = vst.msk [vmem:[%s979 + $0x50] sm:$0xff] %vm491, %v973
  %991 = vst.msk [vmem:[%s979 + $0x58] sm:$0xff] %vm491, %v974
  %992 = vst.msk [vmem:[%s979 + $0x60] sm:$0xff] %vm491, %v975
  %993 = vst.msk [vmem:[%s979 + $0x68] sm:$0xff] %vm491, %v976
  %994 = vst.msk [vmem:[%s979 + $0x70] sm:$0xff] %vm491, %v977
  %995 = vst.msk [vmem:[%s979 + $0x78] sm:$0xff] %vm491, %v978
  // Predicated region
  $region22: #{resblock_forward.5} parent=0 // pred_check
    _
  $region23: #{resblock_forward.5} parent=0 // pred_check_branch
    %997 = sbr.rel (0) target = $region25
  $region24: #{resblock_forward.5} parent=0 // pred_region
    _
  $region25: #{resblock_forward.5} parent=0 // pred_fallthru
    _
  // Predicated region
  $region26: #{resblock_forward.5} parent=0 // pred_check
    _
  $region27: #{resblock_forward.5} parent=0 // pred_check_branch
    %999 = sbr.rel (0) target = $region29
  $region28: #{resblock_forward.5} parent=0 // pred_region
    _
  $region29: #{resblock_forward.5} parent=0 // pred_fallthru
    _

</llo_original>
